<compile_context>
chip_gen: v7x
topology: tpu7x:2x2x1
jax: 0.10.0
libtpu: 0.0.40
codegen_flags: <defaults>
</compile_context>

<pallas_src>
import jax
import jax.numpy as jnp
from jax.experimental import pallas as pl
from jax.experimental.pallas import tpu as pltpu


# --------------------------------------------------------------------------
# Pallas kernel: one grid step == one primitive's full Mapping2DtoND decoder.
# All activations are (C, B*N): channels on sublanes, 128 points on lanes.
# --------------------------------------------------------------------------
def atlasnet_decoder_kernel(pts_ref, lat_ref,
                            w1_ref, s1_ref, sh1_ref,
                            w2_ref, s2_ref, sh2_ref,
                            wl_ref, sl_ref, shl_ref,
                            wlast_ref, blast_ref,
                            out_ref):
    Dt, BN = pts_ref.shape          # (dim_template, B*N)
    Bk, B = lat_ref.shape           # (bottleneck, B)
    N = BN // B

    x = pts_ref[...]                # (Dt, BN)
    lat_t = lat_ref[...]            # (Bk, B)

    # Broadcast latent to (Bk, B*N): the b-th block of N columns gets latent[:, b].
    # Built once (hoisted) via lane-broadcast + concat; no per-layer rework.
    lat_bc = jnp.concatenate(
        [jnp.broadcast_to(lat_t[:, b:b + 1], (Bk, N)) for b in range(B)],
        axis=1)                     # (Bk, BN)

    # ---- layer 1: conv1(x) + latent, bn1, ReLU ----
    # K = Dt (=2) contraction done on the VPU as Dt broadcast FMAs.
    w1 = w1_ref[...]                # (Bk, Dt)
    h = lat_bc
    for d in range(Dt):
        h = h + w1[:, d:d + 1] * x[d:d + 1, :]
    h = jnp.maximum(h * s1_ref[...] + sh1_ref[...], 0.0)        # (Bk, BN)

    # ---- layer 2: conv2, bn2, ReLU ----  single 128-column MXU matmul.
    h = jnp.dot(w2_ref[...], h, preferred_element_type=jnp.float32)   # (H, BN)
    h = jnp.maximum(h * s2_ref[...] + sh2_ref[...], 0.0)

    # ---- hidden conv_list layers (static unroll) ----
    L = wl_ref.shape[0]
    for l in range(L):
        h = jnp.dot(wl_ref[l], h, preferred_element_type=jnp.float32)
        h = jnp.maximum(h * sl_ref[l] + shl_ref[l], 0.0)

    # ---- last_conv (no BN, no activation) ----
    # (Do, BN) store: 128 lane-dense columns (unmasked vst).
    out_ref[...] = (jnp.dot(wlast_ref[...], h, preferred_element_type=jnp.float32)
                    + blast_ref[...])


def atlasnet_forward(template_points_ncw, latent_vector, params):
    """
    template_points_ncw: (n_prim, B, dim_template, N)   -- torch NCW per primitive
    latent_vector:       (B, bottleneck)
    Returns (output_points, geom_props) matching AtlasNet.forward:
        output_points: (B, n_prim, dim_output, N)
    """
    P, B, Dt, N = template_points_ncw.shape
    Bk = params['w1'].shape[1]
    H = params['w2'].shape[1]
    L = params['wl'].shape[1]
    Do = params['wlast'].shape[1]
    BN = B * N

    # Layout plumbing (tiny tensors): present points-on-lanes inputs.
    # (P, B, Dt, N) -> (P, Dt, B*N); latent -> (Bk, B).
    pts = jnp.transpose(template_points_ncw, (0, 2, 1, 3)).reshape(P, Dt, BN)
    pts = pts.astype(jnp.float32)
    lat_t = latent_vector.astype(jnp.float32).T               # (Bk, B)

    out = pl.pallas_call(
        atlasnet_decoder_kernel,
        out_shape=jax.ShapeDtypeStruct((P, Do, BN), jnp.float32),
        grid=(P,),
        in_specs=[
            pl.BlockSpec((None, Dt, BN),  lambda p: (p, 0, 0)),     # pts (points on lanes)
            pl.BlockSpec((Bk, B),         lambda p: (0, 0)),        # latent: constant block, fetched once
            pl.BlockSpec((None, Bk, Dt),  lambda p: (p, 0, 0)),     # w1  (out, in)
            pl.BlockSpec((None, Bk, 1),   lambda p: (p, 0, 0)),     # s1
            pl.BlockSpec((None, Bk, 1),   lambda p: (p, 0, 0)),     # sh1
            pl.BlockSpec((None, H, Bk),   lambda p: (p, 0, 0)),     # w2
            pl.BlockSpec((None, H, 1),    lambda p: (p, 0, 0)),     # s2
            pl.BlockSpec((None, H, 1),    lambda p: (p, 0, 0)),     # sh2
            pl.BlockSpec((None, L, H, H), lambda p: (p, 0, 0, 0)),  # wl
            pl.BlockSpec((None, L, H, 1), lambda p: (p, 0, 0, 0)),  # sl
            pl.BlockSpec((None, L, H, 1), lambda p: (p, 0, 0, 0)),  # shl
            pl.BlockSpec((None, Do, H),   lambda p: (p, 0, 0)),     # wlast
            pl.BlockSpec((None, Do, 1),   lambda p: (p, 0, 0)),     # blast
        ],
        out_specs=pl.BlockSpec((None, Do, BN), lambda p: (p, 0, 0)),
        compiler_params=pltpu.CompilerParams(
            # Shards the primitive axis across the 2 TensorCores on v7x;
            # on v5e/v6e it is just a 2-step serial loop (negligible overhead).
            dimension_semantics=("parallel",)),
    )(pts, lat_t,
      params['w1'], params['s1'], params['sh1'],
      params['w2'], params['s2'], params['sh2'],
      params['wl'], params['sl'], params['shl'],
      params['wlast'], params['blast'])

    # (P, Do, B*N) -> (B, n_prim, dim_output, N).  Few-KB permutation with N
    # kept as the minor dim; pure layout plumbing.
    output_points = jnp.transpose(out.reshape(P, Do, B, N), (2, 0, 1, 3))
    geom_props = {'computed': False}   # TODO(synk): DiffGeomProps (training-only) not implemented
    return output_points, geom_props


# --------------------------------------------------------------------------
# Parameter construction (deterministic, synthetic) + pure-JAX reference.
# --------------------------------------------------------------------------
def fuse_bn(bias, gamma, beta, mean, var, eps=1e-5):
    s = gamma / jnp.sqrt(var + eps)
    sh = (bias - mean) * s + beta
    return s, sh


def make_params(key, n_prim, dim_template, bottleneck, hidden, num_layers, dim_out):
    ks = jax.random.split(key, 16)
    normal = lambda k, shp, sc=0.1: (sc * jax.random.normal(k, shp)).astype(jnp.float32)
    uni = lambda k, shp: jax.random.uniform(k, shp, minval=0.8, maxval=1.2).astype(jnp.float32)

    # Conv1d(kernel=1) weights stored (out_channels, in_channels) per primitive.
    w1 = normal(ks[0], (n_prim, bottleneck, dim_template))
    b1 = normal(ks[1], (n_prim, bottleneck, 1))
    w2 = normal(ks[2], (n_prim, hidden, bottleneck))
    b2 = normal(ks[3], (n_prim, hidden, 1))
    wl = normal(ks[4], (n_prim, num_layers, hidden, hidden))
    bl = normal(ks[5], (n_prim, num_layers, hidden, 1))
    wlast = normal(ks[6], (n_prim, dim_out, hidden))
    blast = normal(ks[7], (n_prim, dim_out, 1))

    # BatchNorm1d (eval mode) parameters, folded with the conv bias into
    # per-channel scale/shift columns (C, 1) that broadcast along lanes.
    s1, sh1 = fuse_bn(b1, uni(ks[8], (n_prim, bottleneck, 1)),
                      normal(ks[9], (n_prim, bottleneck, 1)),
                      jnp.zeros((n_prim, bottleneck, 1), jnp.float32),
                      jnp.ones((n_prim, bottleneck, 1), jnp.float32))
    s2, sh2 = fuse_bn(b2, uni(ks[10], (n_prim, hidden, 1)),
                      normal(ks[11], (n_prim, hidden, 1)),
                      jnp.zeros((n_prim, hidden, 1), jnp.float32),
                      jnp.ones((n_prim, hidden, 1), jnp.float32))
    sl, shl = fuse_bn(bl, uni(ks[12], (n_prim, num_layers, hidden, 1)),
                      normal(ks[13], (n_prim, num_layers, hidden, 1)),
                      jnp.zeros((n_prim, num_layers, hidden, 1), jnp.float32),
                      jnp.ones((n_prim, num_layers, hidden, 1), jnp.float32))

    return dict(w1=w1, s1=s1, sh1=sh1, w2=w2, s2=s2, sh2=sh2,
                wl=wl, sl=sl, shl=shl, wlast=wlast, blast=blast)


def atlasnet_reference(template_points_ncw, latent, params):
    """Pure-JAX reference of the same fused math, in torch NCW layout."""
    P, B, Dt, N = template_points_ncw.shape
    L = params['wl'].shape[1]
    outs = []
    for p in range(P):
        x = template_points_ncw[p]                                       # (B, Dt, N)
        h = jnp.einsum('cd,bdn->bcn', params['w1'][p], x) + latent[:, :, None]
        h = jax.nn.relu(h * params['s1'][p][None] + params['sh1'][p][None])
        h = jnp.einsum('cd,bdn->bcn', params['w2'][p], h)
        h = jax.nn.relu(h * params['s2'][p][None] + params['sh2'][p][None])
        for l in range(L):
            h = jnp.einsum('cd,bdn->bcn', params['wl'][p, l], h)
            h = jax.nn.relu(h * params['sl'][p, l][None] + params['shl'][p, l][None])
        o = jnp.einsum('cd,bdn->bcn', params['wlast'][p], h) + params['blast'][p][None]
        outs.append(o)                                                   # (B, Do, N)
    return jnp.stack(outs, axis=1)                                       # (B, P, Do, N)


if __name__ == "__main__":
    # Small config consistent with AtlasNet:
    #   n_primitives=2, mapping_config: dim_template=2 (SQUARE), bottleneck=32,
    #   hidden_neurons=32, num_layers=2, dim_output=3.
    n_primitives = 2
    B = 2
    dim_template = 2
    bottleneck = 32
    hidden = 32
    num_layers = 2
    dim_out = 3
    total_points = 128                      # input_shape[-1]
    N = total_points // n_primitives        # points per primitive

    key = jax.random.PRNGKey(0)
    k_pts, k_lat, k_par = jax.random.split(key, 3)

    # Template points per primitive in torch NCW layout: (n_prim, B, dim_template, N)
    # (mimics SquareTemplate.get_regular_points -> points in [0, 1)^2)
    template_points = jax.random.uniform(
        k_pts, (n_primitives, B, dim_template, N), dtype=jnp.float32)
    latent_vector = jax.random.normal(k_lat, (B, bottleneck), dtype=jnp.float32)

    params = make_params(k_par, n_primitives, dim_template,
                         bottleneck, hidden, num_layers, dim_out)

    output_points, geom_props = atlasnet_forward(template_points, latent_vector, params)
    output_points = jax.block_until_ready(output_points)

    # Correctness check against a pure-JAX reference of the same math.
    ref = jax.block_until_ready(atlasnet_reference(template_points, latent_vector, params))
    assert output_points.shape == (B, n_primitives, dim_out, N), output_points.shape
    assert geom_props == {'computed': False}
    assert jnp.allclose(output_points, ref, rtol=1e-5, atol=1e-5), \
        float(jnp.max(jnp.abs(output_points - ref)))

    print("KERNEL_OK")
</pallas_src>

<mosaic_0001>
module attributes {stable_mosaic.version = 11 : i64} {
  func.func @atlasnet_decoder_kernel(%arg0: i32, %arg1: memref<1x2x128xf32, #tpu.memory_space<vmem>>, %arg2: memref<32x2xf32, #tpu.memory_space<vmem>>, %arg3: memref<1x32x2xf32, #tpu.memory_space<vmem>>, %arg4: memref<1x32x1xf32, #tpu.memory_space<vmem>>, %arg5: memref<1x32x1xf32, #tpu.memory_space<vmem>>, %arg6: memref<1x32x32xf32, #tpu.memory_space<vmem>>, %arg7: memref<1x32x1xf32, #tpu.memory_space<vmem>>, %arg8: memref<1x32x1xf32, #tpu.memory_space<vmem>>, %arg9: memref<1x2x32x32xf32, #tpu.memory_space<vmem>>, %arg10: memref<1x2x32x1xf32, #tpu.memory_space<vmem>>, %arg11: memref<1x2x32x1xf32, #tpu.memory_space<vmem>>, %arg12: memref<1x3x32xf32, #tpu.memory_space<vmem>>, %arg13: memref<1x3x1xf32, #tpu.memory_space<vmem>>, %arg14: memref<1x3x128xf32, #tpu.memory_space<vmem>>) attributes {dimension_semantics = [#tpu.dimension_semantics<parallel>], iteration_bounds = array<i64: 2>, scalar_prefetch = 0 : i64, scratch_operands = 0 : i64, tpu.core_type = #tpu.core_type<tc>, window_params = [{transform_indices = @transform_0, window_bounds = array<i64: 1, 2, 128>}, {pipeline_mode = #tpu.pipeline_mode<synchronous>, transform_indices = @transform_1, window_bounds = array<i64: 32, 2>}, {transform_indices = @transform_2, window_bounds = array<i64: 1, 32, 2>}, {transform_indices = @transform_3, window_bounds = array<i64: 1, 32, 1>}, {transform_indices = @transform_4, window_bounds = array<i64: 1, 32, 1>}, {transform_indices = @transform_5, window_bounds = array<i64: 1, 32, 32>}, {transform_indices = @transform_6, window_bounds = array<i64: 1, 32, 1>}, {transform_indices = @transform_7, window_bounds = array<i64: 1, 32, 1>}, {transform_indices = @transform_8, window_bounds = array<i64: 1, 2, 32, 32>}, {transform_indices = @transform_9, window_bounds = array<i64: 1, 2, 32, 1>}, {transform_indices = @transform_10, window_bounds = array<i64: 1, 2, 32, 1>}, {transform_indices = @transform_11, window_bounds = array<i64: 1, 3, 32>}, {transform_indices = @transform_12, window_bounds = array<i64: 1, 3, 1>}, {transform_indices = @transform_13, window_bounds = array<i64: 1, 3, 128>}]} {
    %c0 = arith.constant 0 : index
    %c0_0 = arith.constant 0 : index
    %c0_1 = arith.constant 0 : index
    %0 = vector.load %arg1[%c0, %c0_0, %c0_1] : memref<1x2x128xf32, #tpu.memory_space<vmem>>, vector<1x2x128xf32>
    %1 = vector.shape_cast %0 : vector<1x2x128xf32> to vector<2x128xf32>
    %c0_2 = arith.constant 0 : index
    %c0_3 = arith.constant 0 : index
    %2 = vector.load %arg2[%c0_2, %c0_3] : memref<32x2xf32, #tpu.memory_space<vmem>>, vector<32x2xf32>
    %3 = vector.extract_strided_slice %2 {offsets = [0, 0], sizes = [32, 1], strides = [1, 1]} : vector<32x2xf32> to vector<32x1xf32>
    %4 = vector.shape_cast %3 : vector<32x1xf32> to vector<32x1xf32>
    %5 = vector.broadcast %4 : vector<32x1xf32> to vector<32x64xf32>
    %6 = vector.extract_strided_slice %2 {offsets = [0, 1], sizes = [32, 1], strides = [1, 1]} : vector<32x2xf32> to vector<32x1xf32>
    %7 = vector.shape_cast %6 : vector<32x1xf32> to vector<32x1xf32>
    %8 = vector.broadcast %7 : vector<32x1xf32> to vector<32x64xf32>
    %9 = tpu.concatenate %5, %8 in 1 : vector<32x64xf32>, vector<32x64xf32> -> vector<32x128xf32>
    %c0_4 = arith.constant 0 : index
    %c0_5 = arith.constant 0 : index
    %c0_6 = arith.constant 0 : index
    %10 = vector.load %arg3[%c0_4, %c0_5, %c0_6] : memref<1x32x2xf32, #tpu.memory_space<vmem>>, vector<1x32x2xf32>
    %11 = vector.shape_cast %10 : vector<1x32x2xf32> to vector<32x2xf32>
    %12 = vector.extract_strided_slice %11 {offsets = [0, 0], sizes = [32, 1], strides = [1, 1]} : vector<32x2xf32> to vector<32x1xf32>
    %13 = vector.extract_strided_slice %1 {offsets = [0, 0], sizes = [1, 128], strides = [1, 1]} : vector<2x128xf32> to vector<1x128xf32>
    %14 = vector.broadcast %12 : vector<32x1xf32> to vector<32x128xf32>
    %15 = vector.broadcast %13 : vector<1x128xf32> to vector<32x128xf32>
    %16 = arith.mulf %14, %15 : vector<32x128xf32>
    %17 = arith.addf %9, %16 : vector<32x128xf32>
    %18 = vector.extract_strided_slice %11 {offsets = [0, 1], sizes = [32, 1], strides = [1, 1]} : vector<32x2xf32> to vector<32x1xf32>
    %19 = vector.extract_strided_slice %1 {offsets = [1, 0], sizes = [1, 128], strides = [1, 1]} : vector<2x128xf32> to vector<1x128xf32>
    %20 = vector.broadcast %18 : vector<32x1xf32> to vector<32x128xf32>
    %21 = vector.broadcast %19 : vector<1x128xf32> to vector<32x128xf32>
    %22 = arith.mulf %20, %21 : vector<32x128xf32>
    %23 = arith.addf %17, %22 : vector<32x128xf32>
    %c0_7 = arith.constant 0 : index
    %c0_8 = arith.constant 0 : index
    %c0_9 = arith.constant 0 : index
    %24 = vector.load %arg4[%c0_7, %c0_8, %c0_9] : memref<1x32x1xf32, #tpu.memory_space<vmem>>, vector<1x32x1xf32>
    %25 = vector.shape_cast %24 : vector<1x32x1xf32> to vector<32x1xf32>
    %26 = vector.broadcast %25 : vector<32x1xf32> to vector<32x128xf32>
    %27 = arith.mulf %23, %26 : vector<32x128xf32>
    %c0_10 = arith.constant 0 : index
    %c0_11 = arith.constant 0 : index
    %c0_12 = arith.constant 0 : index
    %28 = vector.load %arg5[%c0_10, %c0_11, %c0_12] : memref<1x32x1xf32, #tpu.memory_space<vmem>>, vector<1x32x1xf32>
    %29 = vector.shape_cast %28 : vector<1x32x1xf32> to vector<32x1xf32>
    %30 = vector.broadcast %29 : vector<32x1xf32> to vector<32x128xf32>
    %31 = arith.addf %27, %30 : vector<32x128xf32>
    %cst = arith.constant 0.000000e+00 : f32
    %32 = vector.broadcast %cst : f32 to vector<32x128xf32>
    %33 = arith.maximumf %31, %32 : vector<32x128xf32>
    %c0_13 = arith.constant 0 : index
    %c0_14 = arith.constant 0 : index
    %c0_15 = arith.constant 0 : index
    %34 = vector.load %arg6[%c0_13, %c0_14, %c0_15] : memref<1x32x32xf32, #tpu.memory_space<vmem>>, vector<1x32x32xf32>
    %35 = vector.shape_cast %34 : vector<1x32x32xf32> to vector<32x32xf32>
    %cst_16 = arith.constant dense<0.000000e+00> : vector<32x128xf32>
    %36 = tpu.matmul %35, %33, %cst_16 {dimension_numbers = #tpu.dot_dimension_numbers<[1], [0], [0], [1], [0, 0, 1, 1], [], []>} : vector<32x32xf32>, vector<32x128xf32>, vector<32x128xf32> -> vector<32x128xf32>
    %c0_17 = arith.constant 0 : index
    %c0_18 = arith.constant 0 : index
    %c0_19 = arith.constant 0 : index
    %37 = vector.load %arg7[%c0_17, %c0_18, %c0_19] : memref<1x32x1xf32, #tpu.memory_space<vmem>>, vector<1x32x1xf32>
    %38 = vector.shape_cast %37 : vector<1x32x1xf32> to vector<32x1xf32>
    %39 = vector.broadcast %38 : vector<32x1xf32> to vector<32x128xf32>
    %40 = arith.mulf %36, %39 : vector<32x128xf32>
    %c0_20 = arith.constant 0 : index
    %c0_21 = arith.constant 0 : index
    %c0_22 = arith.constant 0 : index
    %41 = vector.load %arg8[%c0_20, %c0_21, %c0_22] : memref<1x32x1xf32, #tpu.memory_space<vmem>>, vector<1x32x1xf32>
    %42 = vector.shape_cast %41 : vector<1x32x1xf32> to vector<32x1xf32>
    %43 = vector.broadcast %42 : vector<32x1xf32> to vector<32x128xf32>
    %44 = arith.addf %40, %43 : vector<32x128xf32>
    %cst_23 = arith.constant 0.000000e+00 : f32
    %45 = vector.broadcast %cst_23 : f32 to vector<32x128xf32>
    %46 = arith.maximumf %44, %45 : vector<32x128xf32>
    %c0_24 = arith.constant 0 : index
    %c0_25 = arith.constant 0 : index
    %c0_26 = arith.constant 0 : index
    %c0_27 = arith.constant 0 : index
    %47 = vector.load %arg9[%c0_24, %c0_25, %c0_26, %c0_27] : memref<1x2x32x32xf32, #tpu.memory_space<vmem>>, vector<1x1x32x32xf32>
    %48 = vector.shape_cast %47 : vector<1x1x32x32xf32> to vector<32x32xf32>
    %cst_28 = arith.constant dense<0.000000e+00> : vector<32x128xf32>
    %49 = tpu.matmul %48, %46, %cst_28 {dimension_numbers = #tpu.dot_dimension_numbers<[1], [0], [0], [1], [0, 0, 1, 1], [], []>} : vector<32x32xf32>, vector<32x128xf32>, vector<32x128xf32> -> vector<32x128xf32>
    %c0_29 = arith.constant 0 : index
    %c0_30 = arith.constant 0 : index
    %c0_31 = arith.constant 0 : index
    %c0_32 = arith.constant 0 : index
    %50 = vector.load %arg10[%c0_29, %c0_30, %c0_31, %c0_32] : memref<1x2x32x1xf32, #tpu.memory_space<vmem>>, vector<1x1x32x1xf32>
    %51 = vector.shape_cast %50 : vector<1x1x32x1xf32> to vector<32x1xf32>
    %52 = vector.broadcast %51 : vector<32x1xf32> to vector<32x128xf32>
    %53 = arith.mulf %49, %52 : vector<32x128xf32>
    %c0_33 = arith.constant 0 : index
    %c0_34 = arith.constant 0 : index
    %c0_35 = arith.constant 0 : index
    %c0_36 = arith.constant 0 : index
    %54 = vector.load %arg11[%c0_33, %c0_34, %c0_35, %c0_36] : memref<1x2x32x1xf32, #tpu.memory_space<vmem>>, vector<1x1x32x1xf32>
    %55 = vector.shape_cast %54 : vector<1x1x32x1xf32> to vector<32x1xf32>
    %56 = vector.broadcast %55 : vector<32x1xf32> to vector<32x128xf32>
    %57 = arith.addf %53, %56 : vector<32x128xf32>
    %cst_37 = arith.constant 0.000000e+00 : f32
    %58 = vector.broadcast %cst_37 : f32 to vector<32x128xf32>
    %59 = arith.maximumf %57, %58 : vector<32x128xf32>
    %c0_38 = arith.constant 0 : index
    %c1 = arith.constant 1 : index
    %c0_39 = arith.constant 0 : index
    %c0_40 = arith.constant 0 : index
    %60 = vector.load %arg9[%c0_38, %c1, %c0_39, %c0_40] : memref<1x2x32x32xf32, #tpu.memory_space<vmem>>, vector<1x1x32x32xf32>
    %61 = vector.shape_cast %60 : vector<1x1x32x32xf32> to vector<32x32xf32>
    %cst_41 = arith.constant dense<0.000000e+00> : vector<32x128xf32>
    %62 = tpu.matmul %61, %59, %cst_41 {dimension_numbers = #tpu.dot_dimension_numbers<[1], [0], [0], [1], [0, 0, 1, 1], [], []>} : vector<32x32xf32>, vector<32x128xf32>, vector<32x128xf32> -> vector<32x128xf32>
    %c0_42 = arith.constant 0 : index
    %c1_43 = arith.constant 1 : index
    %c0_44 = arith.constant 0 : index
    %c0_45 = arith.constant 0 : index
    %63 = vector.load %arg10[%c0_42, %c1_43, %c0_44, %c0_45] : memref<1x2x32x1xf32, #tpu.memory_space<vmem>>, vector<1x1x32x1xf32>
    %64 = vector.shape_cast %63 : vector<1x1x32x1xf32> to vector<32x1xf32>
    %65 = vector.broadcast %64 : vector<32x1xf32> to vector<32x128xf32>
    %66 = arith.mulf %62, %65 : vector<32x128xf32>
    %c0_46 = arith.constant 0 : index
    %c1_47 = arith.constant 1 : index
    %c0_48 = arith.constant 0 : index
    %c0_49 = arith.constant 0 : index
    %67 = vector.load %arg11[%c0_46, %c1_47, %c0_48, %c0_49] : memref<1x2x32x1xf32, #tpu.memory_space<vmem>>, vector<1x1x32x1xf32>
    %68 = vector.shape_cast %67 : vector<1x1x32x1xf32> to vector<32x1xf32>
    %69 = vector.broadcast %68 : vector<32x1xf32> to vector<32x128xf32>
    %70 = arith.addf %66, %69 : vector<32x128xf32>
    %cst_50 = arith.constant 0.000000e+00 : f32
    %71 = vector.broadcast %cst_50 : f32 to vector<32x128xf32>
    %72 = arith.maximumf %70, %71 : vector<32x128xf32>
    %c0_51 = arith.constant 0 : index
    %c0_52 = arith.constant 0 : index
    %c0_53 = arith.constant 0 : index
    %73 = vector.load %arg12[%c0_51, %c0_52, %c0_53] : memref<1x3x32xf32, #tpu.memory_space<vmem>>, vector<1x3x32xf32>
    %74 = vector.shape_cast %73 : vector<1x3x32xf32> to vector<3x32xf32>
    %cst_54 = arith.constant dense<0.000000e+00> : vector<3x128xf32>
    %75 = tpu.matmul %74, %72, %cst_54 {dimension_numbers = #tpu.dot_dimension_numbers<[1], [0], [0], [1], [0, 0, 1, 1], [], []>} : vector<3x32xf32>, vector<32x128xf32>, vector<3x128xf32> -> vector<3x128xf32>
    %c0_55 = arith.constant 0 : index
    %c0_56 = arith.constant 0 : index
    %c0_57 = arith.constant 0 : index
    %76 = vector.load %arg13[%c0_55, %c0_56, %c0_57] : memref<1x3x1xf32, #tpu.memory_space<vmem>>, vector<1x3x1xf32>
    %77 = vector.shape_cast %76 : vector<1x3x1xf32> to vector<3x1xf32>
    %78 = vector.broadcast %77 : vector<3x1xf32> to vector<3x128xf32>
    %79 = arith.addf %75, %78 : vector<3x128xf32>
    %c0_58 = arith.constant 0 : index
    %c0_59 = arith.constant 0 : index
    %c0_60 = arith.constant 0 : index
    %80 = vector.load %arg14[%c0_58, %c0_59, %c0_60] : memref<1x3x128xf32, #tpu.memory_space<vmem>>, vector<1x3x128xf32>
    %81 = vector.shape_cast %80 : vector<1x3x128xf32> to vector<3x128xf32>
    %82 = vector.shape_cast %79 : vector<3x128xf32> to vector<1x3x128xf32>
    tpu.vector_store %arg14[%c0_58, %c0_59, %c0_60], %82 {strides = array<i32>} : memref<1x3x128xf32, #tpu.memory_space<vmem>>, vector<1x3x128xf32>,
    return
  }
  func.func @transform_0(%arg0: i32) -> (i32, i32, i32) {
    %c0_i32 = arith.constant 0 : i32
    %c0_i32_0 = arith.constant 0 : i32
    %c0_i32_1 = arith.constant 0 : i32
    return %arg0, %c0_i32, %c0_i32_0 : i32, i32, i32
  }
  func.func @transform_1(%arg0: i32) -> (i32, i32) {
    %c0_i32 = arith.constant 0 : i32
    %c0_i32_0 = arith.constant 0 : i32
    %c0_i32_1 = arith.constant 0 : i32
    return %c0_i32, %c0_i32_0 : i32, i32
  }
  func.func @transform_2(%arg0: i32) -> (i32, i32, i32) {
    %c0_i32 = arith.constant 0 : i32
    %c0_i32_0 = arith.constant 0 : i32
    %c0_i32_1 = arith.constant 0 : i32
    return %arg0, %c0_i32, %c0_i32_0 : i32, i32, i32
  }
  func.func @transform_3(%arg0: i32) -> (i32, i32, i32) {
    %c0_i32 = arith.constant 0 : i32
    %c0_i32_0 = arith.constant 0 : i32
    %c0_i32_1 = arith.constant 0 : i32
    return %arg0, %c0_i32, %c0_i32_0 : i32, i32, i32
  }
  func.func @transform_4(%arg0: i32) -> (i32, i32, i32) {
    %c0_i32 = arith.constant 0 : i32
    %c0_i32_0 = arith.constant 0 : i32
    %c0_i32_1 = arith.constant 0 : i32
    return %arg0, %c0_i32, %c0_i32_0 : i32, i32, i32
  }
  func.func @transform_5(%arg0: i32) -> (i32, i32, i32) {
    %c0_i32 = arith.constant 0 : i32
    %c0_i32_0 = arith.constant 0 : i32
    %c0_i32_1 = arith.constant 0 : i32
    return %arg0, %c0_i32, %c0_i32_0 : i32, i32, i32
  }
  func.func @transform_6(%arg0: i32) -> (i32, i32, i32) {
    %c0_i32 = arith.constant 0 : i32
    %c0_i32_0 = arith.constant 0 : i32
    %c0_i32_1 = arith.constant 0 : i32
    return %arg0, %c0_i32, %c0_i32_0 : i32, i32, i32
  }
  func.func @transform_7(%arg0: i32) -> (i32, i32, i32) {
    %c0_i32 = arith.constant 0 : i32
    %c0_i32_0 = arith.constant 0 : i32
    %c0_i32_1 = arith.constant 0 : i32
    return %arg0, %c0_i32, %c0_i32_0 : i32, i32, i32
  }
  func.func @transform_8(%arg0: i32) -> (i32, i32, i32, i32) {
    %c0_i32 = arith.constant 0 : i32
    %c0_i32_0 = arith.constant 0 : i32
    %c0_i32_1 = arith.constant 0 : i32
    %c0_i32_2 = arith.constant 0 : i32
    return %arg0, %c0_i32, %c0_i32_0, %c0_i32_1 : i32, i32, i32, i32
  }
  func.func @transform_9(%arg0: i32) -> (i32, i32, i32, i32) {
    %c0_i32 = arith.constant 0 : i32
    %c0_i32_0 = arith.constant 0 : i32
    %c0_i32_1 = arith.constant 0 : i32
    %c0_i32_2 = arith.constant 0 : i32
    return %arg0, %c0_i32, %c0_i32_0, %c0_i32_1 : i32, i32, i32, i32
  }
  func.func @transform_10(%arg0: i32) -> (i32, i32, i32, i32) {
    %c0_i32 = arith.constant 0 : i32
    %c0_i32_0 = arith.constant 0 : i32
    %c0_i32_1 = arith.constant 0 : i32
    %c0_i32_2 = arith.constant 0 : i32
    return %arg0, %c0_i32, %c0_i32_0, %c0_i32_1 : i32, i32, i32, i32
  }
  func.func @transform_11(%arg0: i32) -> (i32, i32, i32) {
    %c0_i32 = arith.constant 0 : i32
    %c0_i32_0 = arith.constant 0 : i32
    %c0_i32_1 = arith.constant 0 : i32
    return %arg0, %c0_i32, %c0_i32_0 : i32, i32, i32
  }
  func.func @transform_12(%arg0: i32) -> (i32, i32, i32) {
    %c0_i32 = arith.constant 0 : i32
    %c0_i32_0 = arith.constant 0 : i32
    %c0_i32_1 = arith.constant 0 : i32
    return %arg0, %c0_i32, %c0_i32_0 : i32, i32, i32
  }
  func.func @transform_13(%arg0: i32) -> (i32, i32, i32) {
    %c0_i32 = arith.constant 0 : i32
    %c0_i32_0 = arith.constant 0 : i32
    %c0_i32_1 = arith.constant 0 : i32
    return %arg0, %c0_i32, %c0_i32_0 : i32, i32, i32
  }
}

</mosaic_0001>

<llo_original>
// kernel: tpu_custom_call.1
$region0: #{tpu_custom_call.1}
  #allocation0 [shape = 'u32[]', space=smem, size = 0x4, offset = 0x4, fixed_abs, tag = 'smem constant byte address 0x4 - core index']
  #allocation1 [shape = 'u32[144,128]{1,0:T(1,128)}', space=vmem, size = 0x12000, scoped, tag = 'internal scratch']
  %s0 = inlined_call_operand.vmem [shape: f32[2,2,128], index: 0, kind: input, shape index: {}]
  %s1 = inlined_call_operand.vmem [shape: f32[32,2], index: 1, kind: input, shape index: {}]
  %s2 = inlined_call_operand.vmem [shape: f32[2,32,2], index: 2, kind: input, shape index: {}]
  %s3 = inlined_call_operand.vmem [shape: f32[2,32,1], index: 3, kind: input, shape index: {}]
  %s4 = inlined_call_operand.vmem [shape: f32[2,32,1], index: 4, kind: input, shape index: {}]
  %s5 = inlined_call_operand.vmem [shape: f32[2,32,32], index: 5, kind: input, shape index: {}]
  %s6 = inlined_call_operand.vmem [shape: f32[2,32,1], index: 6, kind: input, shape index: {}]
  %s7 = inlined_call_operand.vmem [shape: f32[2,32,1], index: 7, kind: input, shape index: {}]
  %s8 = inlined_call_operand.vmem [shape: f32[2,2,32,32], index: 8, kind: input, shape index: {}]
  %s9 = inlined_call_operand.vmem [shape: f32[2,2,32,1], index: 9, kind: input, shape index: {}]
  %s10 = inlined_call_operand.vmem [shape: f32[2,2,32,1], index: 10, kind: input, shape index: {}]
  %s11 = inlined_call_operand.vmem [shape: f32[2,3,32], index: 11, kind: input, shape index: {}]
  %s12 = inlined_call_operand.vmem [shape: f32[2,3,1], index: 12, kind: input, shape index: {}]
  %s13 = inlined_call_operand.vmem [shape: f32[2,3,128], index: 13, kind: output, shape index: {}]
  %s14 = sld [smem:[#allocation0]]
  $region85: #{tpu_custom_call.1} parent=0
    _
  %s16 = ssub.s32 1, %s14
  %s17 = scalar_select 0, %s16, %s14
  loop: start=0, step=1, limit=4
  $region2: #{tpu_custom_call.1} parent=0 // loop_pre_header
    _
  $region3: #{tpu_custom_call.1} parent=0 // loop_header
    %s19 = sphi 0, %s23
    %p20 = scmp.ge.s32.totalorder %s19, 4
    %s29 = sphi 0, %s31
    %s32 = sphi 0, %s29
    %s33 = sphi 0, %s32
    %s49 = sphi 0, %s33
    %s53 = sphi 0, %s53
    %s55 = sphi 0, %s53
    %s56 = sphi 0, %s55
    %s70 = sphi 0, %s56
    %s76 = sphi 0, %s78
    %s79 = sphi 0, %s76
    %s80 = sphi 0, %s79
    %s96 = sphi 0, %s80
    %s102 = sphi 0, %s104
    %s105 = sphi 0, %s102
    %s106 = sphi 0, %s105
    %s122 = sphi 0, %s106
    %s128 = sphi 0, %s130
    %s131 = sphi 0, %s128
    %s132 = sphi 0, %s131
    %s148 = sphi 0, %s132
    %s154 = sphi 0, %s156
    %s157 = sphi 0, %s154
    %s158 = sphi 0, %s157
    %s174 = sphi 0, %s158
    %s180 = sphi 0, %s182
    %s183 = sphi 0, %s180
    %s184 = sphi 0, %s183
    %s200 = sphi 0, %s184
    %s206 = sphi 0, %s208
    %s209 = sphi 0, %s206
    %s210 = sphi 0, %s209
    %s226 = sphi 0, %s210
    %s232 = sphi 0, %s234
    %s235 = sphi 0, %s232
    %s236 = sphi 0, %s235
    %s252 = sphi 0, %s236
    %s258 = sphi 0, %s260
    %s261 = sphi 0, %s258
    %s262 = sphi 0, %s261
    %s278 = sphi 0, %s262
    %s284 = sphi 0, %s286
    %s287 = sphi 0, %s284
    %s288 = sphi 0, %s287
    %s304 = sphi 0, %s288
    %s310 = sphi 0, %s312
    %s313 = sphi 0, %s310
    %s314 = sphi 0, %s313
    %s330 = sphi 0, %s314
    %s336 = sphi 0, %s338
    %s339 = sphi 0, %s336
    %s340 = sphi 0, %s339
    %s356 = sphi 0, %s340
    %s362 = sphi 0, %s364
    %s365 = sphi 0, %s362
    %s366 = sphi 0, %s365
    %s382 = sphi 0, %s366
  $region4: #{tpu_custom_call.1} parent=0 // loop_header_branch
    %22 = sbr.rel (%p20) target = $region8
  $region5: #{tpu_custom_call.1} parent=0 // loop_body
    %s24 = ssub.s32 %s19, 1
    %s25 = ssub.s32 %s19, 2
    %s26 = sadd.s32 %s19, 1
    %s27 = ssub.s32 %s19, %s26
    %p28 = scmp.eq.s32.totalorder %s27, 0
    %s30 = sadd.s32 %s29, 1
    %s31 = scalar_select %p28, %s29, %s30
    %p34 = pneg %p28
    %p35 = scmp.eq.s32.totalorder %s19, 1
    %p36 = por %p34, %p35
    %p37 = scmp.ne.s32.totalorder %s29, %s32
    %p38 = scmp.eq.s32.totalorder %s19, 0
    %p39 = por %p37, %p38
    %p40 = scmp.ne.s32.totalorder %s29, %s32
    %p41 = scmp.eq.s32.totalorder %s24, 1
    %p42 = por %p40, %p41
    %p43 = scmp.ne.s32.totalorder %s32, %s33
    %p44 = scmp.eq.s32.totalorder %s24, 0
    %p45 = por %p43, %p44
    %p46 = scmp.ne.s32.totalorder %s32, %s33
    %p47 = scmp.eq.s32.totalorder %s25, 1
    %p48 = por %p46, %p47
    %p50 = scmp.ne.s32.totalorder %s33, %s49
    %p51 = scmp.eq.s32.totalorder %s25, 0
    %p52 = por %p50, %p51
    %s54 = sadd.s32 %s53, 1
    %p57 = scmp.eq.s32.totalorder %s19, 1
    %p58 = scmp.ne.s32.totalorder %s53, %s55
    %p59 = scmp.eq.s32.totalorder %s19, 0
    %p60 = por %p58, %p59
    %p61 = scmp.ne.s32.totalorder %s53, %s55
    %p62 = scmp.eq.s32.totalorder %s24, 1
    %p63 = por %p61, %p62
    %p64 = scmp.ne.s32.totalorder %s55, %s56
    %p65 = scmp.eq.s32.totalorder %s24, 0
    %p66 = por %p64, %p65
    %p67 = scmp.ne.s32.totalorder %s55, %s56
    %p68 = scmp.eq.s32.totalorder %s25, 1
    %p69 = por %p67, %p68
    %p71 = scmp.ne.s32.totalorder %s56, %s70
    %p72 = scmp.eq.s32.totalorder %s25, 0
    %p73 = por %p71, %p72
    %s74 = ssub.s32 %s19, %s26
    %p75 = scmp.eq.s32.totalorder %s74, 0
    %s77 = sadd.s32 %s76, 1
    %s78 = scalar_select %p75, %s76, %s77
    %p81 = pneg %p75
    %p82 = scmp.eq.s32.totalorder %s19, 1
    %p83 = por %p81, %p82
    %p84 = scmp.ne.s32.totalorder %s76, %s79
    %p85 = scmp.eq.s32.totalorder %s19, 0
    %p86 = por %p84, %p85
    %p87 = scmp.ne.s32.totalorder %s76, %s79
    %p88 = scmp.eq.s32.totalorder %s24, 1
    %p89 = por %p87, %p88
    %p90 = scmp.ne.s32.totalorder %s79, %s80
    %p91 = scmp.eq.s32.totalorder %s24, 0
    %p92 = por %p90, %p91
    %p93 = scmp.ne.s32.totalorder %s79, %s80
    %p94 = scmp.eq.s32.totalorder %s25, 1
    %p95 = por %p93, %p94
    %p97 = scmp.ne.s32.totalorder %s80, %s96
    %p98 = scmp.eq.s32.totalorder %s25, 0
    %p99 = por %p97, %p98
    %s100 = ssub.s32 %s19, %s26
    %p101 = scmp.eq.s32.totalorder %s100, 0
    %s103 = sadd.s32 %s102, 1
    %s104 = scalar_select %p101, %s102, %s103
    %p107 = pneg %p101
    %p108 = scmp.eq.s32.totalorder %s19, 1
    %p109 = por %p107, %p108
    %p110 = scmp.ne.s32.totalorder %s102, %s105
    %p111 = scmp.eq.s32.totalorder %s19, 0
    %p112 = por %p110, %p111
    %p113 = scmp.ne.s32.totalorder %s102, %s105
    %p114 = scmp.eq.s32.totalorder %s24, 1
    %p115 = por %p113, %p114
    %p116 = scmp.ne.s32.totalorder %s105, %s106
    %p117 = scmp.eq.s32.totalorder %s24, 0
    %p118 = por %p116, %p117
    %p119 = scmp.ne.s32.totalorder %s105, %s106
    %p120 = scmp.eq.s32.totalorder %s25, 1
    %p121 = por %p119, %p120
    %p123 = scmp.ne.s32.totalorder %s106, %s122
    %p124 = scmp.eq.s32.totalorder %s25, 0
    %p125 = por %p123, %p124
    %s126 = ssub.s32 %s19, %s26
    %p127 = scmp.eq.s32.totalorder %s126, 0
    %s129 = sadd.s32 %s128, 1
    %s130 = scalar_select %p127, %s128, %s129
    %p133 = pneg %p127
    %p134 = scmp.eq.s32.totalorder %s19, 1
    %p135 = por %p133, %p134
    %p136 = scmp.ne.s32.totalorder %s128, %s131
    %p137 = scmp.eq.s32.totalorder %s19, 0
    %p138 = por %p136, %p137
    %p139 = scmp.ne.s32.totalorder %s128, %s131
    %p140 = scmp.eq.s32.totalorder %s24, 1
    %p141 = por %p139, %p140
    %p142 = scmp.ne.s32.totalorder %s131, %s132
    %p143 = scmp.eq.s32.totalorder %s24, 0
    %p144 = por %p142, %p143
    %p145 = scmp.ne.s32.totalorder %s131, %s132
    %p146 = scmp.eq.s32.totalorder %s25, 1
    %p147 = por %p145, %p146
    %p149 = scmp.ne.s32.totalorder %s132, %s148
    %p150 = scmp.eq.s32.totalorder %s25, 0
    %p151 = por %p149, %p150
    %s152 = ssub.s32 %s19, %s26
    %p153 = scmp.eq.s32.totalorder %s152, 0
    %s155 = sadd.s32 %s154, 1
    %s156 = scalar_select %p153, %s154, %s155
    %p159 = pneg %p153
    %p160 = scmp.eq.s32.totalorder %s19, 1
    %p161 = por %p159, %p160
    %p162 = scmp.ne.s32.totalorder %s154, %s157
    %p163 = scmp.eq.s32.totalorder %s19, 0
    %p164 = por %p162, %p163
    %p165 = scmp.ne.s32.totalorder %s154, %s157
    %p166 = scmp.eq.s32.totalorder %s24, 1
    %p167 = por %p165, %p166
    %p168 = scmp.ne.s32.totalorder %s157, %s158
    %p169 = scmp.eq.s32.totalorder %s24, 0
    %p170 = por %p168, %p169
    %p171 = scmp.ne.s32.totalorder %s157, %s158
    %p172 = scmp.eq.s32.totalorder %s25, 1
    %p173 = por %p171, %p172
    %p175 = scmp.ne.s32.totalorder %s158, %s174
    %p176 = scmp.eq.s32.totalorder %s25, 0
    %p177 = por %p175, %p176
    %s178 = ssub.s32 %s19, %s26
    %p179 = scmp.eq.s32.totalorder %s178, 0
    %s181 = sadd.s32 %s180, 1
    %s182 = scalar_select %p179, %s180, %s181
    %p185 = pneg %p179
    %p186 = scmp.eq.s32.totalorder %s19, 1
    %p187 = por %p185, %p186
    %p188 = scmp.ne.s32.totalorder %s180, %s183
    %p189 = scmp.eq.s32.totalorder %s19, 0
    %p190 = por %p188, %p189
    %p191 = scmp.ne.s32.totalorder %s180, %s183
    %p192 = scmp.eq.s32.totalorder %s24, 1
    %p193 = por %p191, %p192
    %p194 = scmp.ne.s32.totalorder %s183, %s184
    %p195 = scmp.eq.s32.totalorder %s24, 0
    %p196 = por %p194, %p195
    %p197 = scmp.ne.s32.totalorder %s183, %s184
    %p198 = scmp.eq.s32.totalorder %s25, 1
    %p199 = por %p197, %p198
    %p201 = scmp.ne.s32.totalorder %s184, %s200
    %p202 = scmp.eq.s32.totalorder %s25, 0
    %p203 = por %p201, %p202
    %s204 = ssub.s32 %s19, %s26
    %p205 = scmp.eq.s32.totalorder %s204, 0
    %s207 = sadd.s32 %s206, 1
    %s208 = scalar_select %p205, %s206, %s207
    %p211 = pneg %p205
    %p212 = scmp.eq.s32.totalorder %s19, 1
    %p213 = por %p211, %p212
    %p214 = scmp.ne.s32.totalorder %s206, %s209
    %p215 = scmp.eq.s32.totalorder %s19, 0
    %p216 = por %p214, %p215
    %p217 = scmp.ne.s32.totalorder %s206, %s209
    %p218 = scmp.eq.s32.totalorder %s24, 1
    %p219 = por %p217, %p218
    %p220 = scmp.ne.s32.totalorder %s209, %s210
    %p221 = scmp.eq.s32.totalorder %s24, 0
    %p222 = por %p220, %p221
    %p223 = scmp.ne.s32.totalorder %s209, %s210
    %p224 = scmp.eq.s32.totalorder %s25, 1
    %p225 = por %p223, %p224
    %p227 = scmp.ne.s32.totalorder %s210, %s226
    %p228 = scmp.eq.s32.totalorder %s25, 0
    %p229 = por %p227, %p228
    %s230 = ssub.s32 %s19, %s26
    %p231 = scmp.eq.s32.totalorder %s230, 0
    %s233 = sadd.s32 %s232, 1
    %s234 = scalar_select %p231, %s232, %s233
    %p237 = pneg %p231
    %p238 = scmp.eq.s32.totalorder %s19, 1
    %p239 = por %p237, %p238
    %p240 = scmp.ne.s32.totalorder %s232, %s235
    %p241 = scmp.eq.s32.totalorder %s19, 0
    %p242 = por %p240, %p241
    %p243 = scmp.ne.s32.totalorder %s232, %s235
    %p244 = scmp.eq.s32.totalorder %s24, 1
    %p245 = por %p243, %p244
    %p246 = scmp.ne.s32.totalorder %s235, %s236
    %p247 = scmp.eq.s32.totalorder %s24, 0
    %p248 = por %p246, %p247
    %p249 = scmp.ne.s32.totalorder %s235, %s236
    %p250 = scmp.eq.s32.totalorder %s25, 1
    %p251 = por %p249, %p250
    %p253 = scmp.ne.s32.totalorder %s236, %s252
    %p254 = scmp.eq.s32.totalorder %s25, 0
    %p255 = por %p253, %p254
    %s256 = ssub.s32 %s19, %s26
    %p257 = scmp.eq.s32.totalorder %s256, 0
    %s259 = sadd.s32 %s258, 1
    %s260 = scalar_select %p257, %s258, %s259
    %p263 = pneg %p257
    %p264 = scmp.eq.s32.totalorder %s19, 1
    %p265 = por %p263, %p264
    %p266 = scmp.ne.s32.totalorder %s258, %s261
    %p267 = scmp.eq.s32.totalorder %s19, 0
    %p268 = por %p266, %p267
    %p269 = scmp.ne.s32.totalorder %s258, %s261
    %p270 = scmp.eq.s32.totalorder %s24, 1
    %p271 = por %p269, %p270
    %p272 = scmp.ne.s32.totalorder %s261, %s262
    %p273 = scmp.eq.s32.totalorder %s24, 0
    %p274 = por %p272, %p273
    %p275 = scmp.ne.s32.totalorder %s261, %s262
    %p276 = scmp.eq.s32.totalorder %s25, 1
    %p277 = por %p275, %p276
    %p279 = scmp.ne.s32.totalorder %s262, %s278
    %p280 = scmp.eq.s32.totalorder %s25, 0
    %p281 = por %p279, %p280
    %s282 = ssub.s32 %s19, %s26
    %p283 = scmp.eq.s32.totalorder %s282, 0
    %s285 = sadd.s32 %s284, 1
    %s286 = scalar_select %p283, %s284, %s285
    %p289 = pneg %p283
    %p290 = scmp.eq.s32.totalorder %s19, 1
    %p291 = por %p289, %p290
    %p292 = scmp.ne.s32.totalorder %s284, %s287
    %p293 = scmp.eq.s32.totalorder %s19, 0
    %p294 = por %p292, %p293
    %p295 = scmp.ne.s32.totalorder %s284, %s287
    %p296 = scmp.eq.s32.totalorder %s24, 1
    %p297 = por %p295, %p296
    %p298 = scmp.ne.s32.totalorder %s287, %s288
    %p299 = scmp.eq.s32.totalorder %s24, 0
    %p300 = por %p298, %p299
    %p301 = scmp.ne.s32.totalorder %s287, %s288
    %p302 = scmp.eq.s32.totalorder %s25, 1
    %p303 = por %p301, %p302
    %p305 = scmp.ne.s32.totalorder %s288, %s304
    %p306 = scmp.eq.s32.totalorder %s25, 0
    %p307 = por %p305, %p306
    %s308 = ssub.s32 %s19, %s26
    %p309 = scmp.eq.s32.totalorder %s308, 0
    %s311 = sadd.s32 %s310, 1
    %s312 = scalar_select %p309, %s310, %s311
    %p315 = pneg %p309
    %p316 = scmp.eq.s32.totalorder %s19, 1
    %p317 = por %p315, %p316
    %p318 = scmp.ne.s32.totalorder %s310, %s313
    %p319 = scmp.eq.s32.totalorder %s19, 0
    %p320 = por %p318, %p319
    %p321 = scmp.ne.s32.totalorder %s310, %s313
    %p322 = scmp.eq.s32.totalorder %s24, 1
    %p323 = por %p321, %p322
    %p324 = scmp.ne.s32.totalorder %s313, %s314
    %p325 = scmp.eq.s32.totalorder %s24, 0
    %p326 = por %p324, %p325
    %p327 = scmp.ne.s32.totalorder %s313, %s314
    %p328 = scmp.eq.s32.totalorder %s25, 1
    %p329 = por %p327, %p328
    %p331 = scmp.ne.s32.totalorder %s314, %s330
    %p332 = scmp.eq.s32.totalorder %s25, 0
    %p333 = por %p331, %p332
    %s334 = ssub.s32 %s19, %s26
    %p335 = scmp.eq.s32.totalorder %s334, 0
    %s337 = sadd.s32 %s336, 1
    %s338 = scalar_select %p335, %s336, %s337
    %p341 = pneg %p335
    %p342 = scmp.eq.s32.totalorder %s19, 1
    %p343 = por %p341, %p342
    %p344 = scmp.ne.s32.totalorder %s336, %s339
    %p345 = scmp.eq.s32.totalorder %s19, 0
    %p346 = por %p344, %p345
    %p347 = scmp.ne.s32.totalorder %s336, %s339
    %p348 = scmp.eq.s32.totalorder %s24, 1
    %p349 = por %p347, %p348
    %p350 = scmp.ne.s32.totalorder %s339, %s340
    %p351 = scmp.eq.s32.totalorder %s24, 0
    %p352 = por %p350, %p351
    %p353 = scmp.ne.s32.totalorder %s339, %s340
    %p354 = scmp.eq.s32.totalorder %s25, 1
    %p355 = por %p353, %p354
    %p357 = scmp.ne.s32.totalorder %s340, %s356
    %p358 = scmp.eq.s32.totalorder %s25, 0
    %p359 = por %p357, %p358
    %s360 = ssub.s32 %s19, %s26
    %p361 = scmp.eq.s32.totalorder %s360, 0
    %s363 = sadd.s32 %s362, 1
    %s364 = scalar_select %p361, %s362, %s363
    %p367 = pneg %p361
    %p368 = scmp.eq.s32.totalorder %s19, 1
    %p369 = por %p367, %p368
    %p370 = scmp.ne.s32.totalorder %s362, %s365
    %p371 = scmp.eq.s32.totalorder %s19, 0
    %p372 = por %p370, %p371
    %p373 = scmp.ne.s32.totalorder %s362, %s365
    %p374 = scmp.eq.s32.totalorder %s24, 1
    %p375 = por %p373, %p374
    %p376 = scmp.ne.s32.totalorder %s365, %s366
    %p377 = scmp.eq.s32.totalorder %s24, 0
    %p378 = por %p376, %p377
    %p379 = scmp.ne.s32.totalorder %s365, %s366
    %p380 = scmp.eq.s32.totalorder %s25, 1
    %p381 = por %p379, %p380
    %p383 = scmp.ne.s32.totalorder %s366, %s382
    %p384 = scmp.eq.s32.totalorder %s25, 0
    %p385 = por %p383, %p384
    %p386 = scmp.le.s32.totalorder 1, %s19
    %p387 = scmp.lt.s32.totalorder %s19, 3
    %p388 = pnand %p386, %p387
    %p389 = pneg %p388
    // Predicated region
    $region9: #{tpu_custom_call.1} parent=5 // pred_check
      _
    $region10: #{tpu_custom_call.1} parent=5 // pred_check_branch
      %391 = sbr.rel (%p388) target = $region12
    $region11: #{tpu_custom_call.1} parent=5 // pred_region
      %s392 = ssub.s32 %s19, 1
      // Predicated region
      $region13: #{tpu_custom_call.1} parent=11 // pred_check
        %p393 = pneg %p66
      $region14: #{tpu_custom_call.1} parent=11 // pred_check_branch
        %395 = sbr.rel (%p393) target = $region16
      $region15: #{tpu_custom_call.1} parent=11 // pred_region
        _
      $region16: #{tpu_custom_call.1} parent=11 // pred_fallthru
        _
    $region12: #{tpu_custom_call.1} parent=5 // pred_fallthru
      _
    %p396 = scmp.lt.s32.totalorder %s19, 2
    // Predicated region
    $region17: #{tpu_custom_call.1} parent=5 // pred_check
      %p397 = pneg %p396
    $region18: #{tpu_custom_call.1} parent=5 // pred_check_branch
      %399 = sbr.rel (%p397) target = $region20
    $region19: #{tpu_custom_call.1} parent=5 // pred_region
      // Predicated region
      $region21: #{tpu_custom_call.1} parent=19 // pred_check
        %p400 = pneg %p39
      $region22: #{tpu_custom_call.1} parent=19 // pred_check_branch
        %402 = sbr.rel (%p400) target = $region24
      $region23: #{tpu_custom_call.1} parent=19 // pred_region
        %p403 = scmp.lt.s32.totalorder %s19, 1
        %s404 = scalar_select %p403, %s19, 1
        %s405 = smul.addr %s404, 2
        %s406 = scalar_lea.vmem %s0, %s405
      $region24: #{tpu_custom_call.1} parent=19 // pred_fallthru
        _
      // Predicated region
      $region25: #{tpu_custom_call.1} parent=19 // pred_check
        %p407 = pneg %p86
      $region26: #{tpu_custom_call.1} parent=19 // pred_check_branch
        %409 = sbr.rel (%p407) target = $region28
      $region27: #{tpu_custom_call.1} parent=19 // pred_region
        %p410 = scmp.lt.s32.totalorder %s19, 1
        %s411 = scalar_select %p410, %s19, 1
        %s412 = smul.addr %s411, 4
        %s413 = smul.addr %s412, 8
        %s414 = scalar_lea.vmem %s2, %s413
      $region28: #{tpu_custom_call.1} parent=19 // pred_fallthru
        _
      // Predicated region
      $region29: #{tpu_custom_call.1} parent=19 // pred_check
        %p415 = pneg %p112
      $region30: #{tpu_custom_call.1} parent=19 // pred_check_branch
        %417 = sbr.rel (%p415) target = $region32
      $region31: #{tpu_custom_call.1} parent=19 // pred_region
        %p418 = scmp.lt.s32.totalorder %s19, 1
        %s419 = scalar_select %p418, %s19, 1
        %s420 = smul.addr %s419, 4
        %s421 = smul.addr %s420, 8
        %s422 = scalar_lea.vmem %s3, %s421
      $region32: #{tpu_custom_call.1} parent=19 // pred_fallthru
        _
      // Predicated region
      $region33: #{tpu_custom_call.1} parent=19 // pred_check
        %p423 = pneg %p138
      $region34: #{tpu_custom_call.1} parent=19 // pred_check_branch
        %425 = sbr.rel (%p423) target = $region36
      $region35: #{tpu_custom_call.1} parent=19 // pred_region
        %p426 = scmp.lt.s32.totalorder %s19, 1
        %s427 = scalar_select %p426, %s19, 1
        %s428 = smul.addr %s427, 4
        %s429 = smul.addr %s428, 8
        %s430 = scalar_lea.vmem %s4, %s429
      $region36: #{tpu_custom_call.1} parent=19 // pred_fallthru
        _
      // Predicated region
      $region37: #{tpu_custom_call.1} parent=19 // pred_check
        %p431 = pneg %p164
      $region38: #{tpu_custom_call.1} parent=19 // pred_check_branch
        %433 = sbr.rel (%p431) target = $region40
      $region39: #{tpu_custom_call.1} parent=19 // pred_region
        %p434 = scmp.lt.s32.totalorder %s19, 1
        %s435 = scalar_select %p434, %s19, 1
        %s436 = smul.addr %s435, 4
        %s437 = smul.addr %s436, 8
        %s438 = scalar_lea.vmem %s5, %s437
      $region40: #{tpu_custom_call.1} parent=19 // pred_fallthru
        _
      // Predicated region
      $region41: #{tpu_custom_call.1} parent=19 // pred_check
        %p439 = pneg %p190
      $region42: #{tpu_custom_call.1} parent=19 // pred_check_branch
        %441 = sbr.rel (%p439) target = $region44
      $region43: #{tpu_custom_call.1} parent=19 // pred_region
        %p442 = scmp.lt.s32.totalorder %s19, 1
        %s443 = scalar_select %p442, %s19, 1
        %s444 = smul.addr %s443, 4
        %s445 = smul.addr %s444, 8
        %s446 = scalar_lea.vmem %s6, %s445
      $region44: #{tpu_custom_call.1} parent=19 // pred_fallthru
        _
      // Predicated region
      $region45: #{tpu_custom_call.1} parent=19 // pred_check
        %p447 = pneg %p216
      $region46: #{tpu_custom_call.1} parent=19 // pred_check_branch
        %449 = sbr.rel (%p447) target = $region48
      $region47: #{tpu_custom_call.1} parent=19 // pred_region
        %p450 = scmp.lt.s32.totalorder %s19, 1
        %s451 = scalar_select %p450, %s19, 1
        %s452 = smul.addr %s451, 4
        %s453 = smul.addr %s452, 8
        %s454 = scalar_lea.vmem %s7, %s453
      $region48: #{tpu_custom_call.1} parent=19 // pred_fallthru
        _
      // Predicated region
      $region49: #{tpu_custom_call.1} parent=19 // pred_check
        %p455 = pneg %p242
      $region50: #{tpu_custom_call.1} parent=19 // pred_check_branch
        %457 = sbr.rel (%p455) target = $region52
      $region51: #{tpu_custom_call.1} parent=19 // pred_region
        %p458 = scmp.lt.s32.totalorder %s19, 1
        %s459 = scalar_select %p458, %s19, 1
        %s460 = smul.addr %s459, 8
        %s461 = smul.addr %s460, 8
        %s462 = scalar_lea.vmem %s8, %s461
      $region52: #{tpu_custom_call.1} parent=19 // pred_fallthru
        _
      // Predicated region
      $region53: #{tpu_custom_call.1} parent=19 // pred_check
        %p463 = pneg %p268
      $region54: #{tpu_custom_call.1} parent=19 // pred_check_branch
        %465 = sbr.rel (%p463) target = $region56
      $region55: #{tpu_custom_call.1} parent=19 // pred_region
        %p466 = scmp.lt.s32.totalorder %s19, 1
        %s467 = scalar_select %p466, %s19, 1
        %s468 = smul.addr %s467, 8
        %s469 = smul.addr %s468, 8
        %s470 = scalar_lea.vmem %s9, %s469
      $region56: #{tpu_custom_call.1} parent=19 // pred_fallthru
        _
      // Predicated region
      $region57: #{tpu_custom_call.1} parent=19 // pred_check
        %p471 = pneg %p294
      $region58: #{tpu_custom_call.1} parent=19 // pred_check_branch
        %473 = sbr.rel (%p471) target = $region60
      $region59: #{tpu_custom_call.1} parent=19 // pred_region
        %p474 = scmp.lt.s32.totalorder %s19, 1
        %s475 = scalar_select %p474, %s19, 1
        %s476 = smul.addr %s475, 8
        %s477 = smul.addr %s476, 8
        %s478 = scalar_lea.vmem %s10, %s477
      $region60: #{tpu_custom_call.1} parent=19 // pred_fallthru
        _
      // Predicated region
      $region61: #{tpu_custom_call.1} parent=19 // pred_check
        %p479 = pneg %p320
      $region62: #{tpu_custom_call.1} parent=19 // pred_check_branch
        %481 = sbr.rel (%p479) target = $region64
      $region63: #{tpu_custom_call.1} parent=19 // pred_region
        %p482 = scmp.lt.s32.totalorder %s19, 1
        %s483 = scalar_select %p482, %s19, 1
        %s484 = smul.addr %s483, 4
        %s485 = scalar_lea.vmem %s11, %s484
      $region64: #{tpu_custom_call.1} parent=19 // pred_fallthru
        _
      // Predicated region
      $region65: #{tpu_custom_call.1} parent=19 // pred_check
        %p486 = pneg %p346
      $region66: #{tpu_custom_call.1} parent=19 // pred_check_branch
        %488 = sbr.rel (%p486) target = $region68
      $region67: #{tpu_custom_call.1} parent=19 // pred_region
        %p489 = scmp.lt.s32.totalorder %s19, 1
        %s490 = scalar_select %p489, %s19, 1
        %s491 = smul.addr %s490, 4
        %s492 = scalar_lea.vmem %s12, %s491
      $region68: #{tpu_custom_call.1} parent=19 // pred_fallthru
        _
    $region20: #{tpu_custom_call.1} parent=5 // pred_fallthru
      _
    %p493 = scmp.le.s32.totalorder 1, %s19
    %p494 = scmp.lt.s32.totalorder %s19, 3
    %p495 = pnand %p493, %p494
    %p496 = pneg %p495
    // Predicated region
    $region69: #{tpu_custom_call.1} parent=5 // pred_check
      _
    $region70: #{tpu_custom_call.1} parent=5 // pred_check_branch
      %498 = sbr.rel (%p495) target = $region72
    $region71: #{tpu_custom_call.1} parent=5 // pred_region
      %s499 = ssub.s32 %s19, 1
      %p500 = scmp.lt.s32.totalorder %s24, 1
      %s501 = scalar_select %p500, %s24, 1
      %s502 = smul.addr %s501, 2
      %s503 = scalar_lea.vmem %s0, %s502
      %p504 = pneg %p45
      %p505 = pneg %p42
      %p506 = pneg %p66
      %p507 = pneg %p63
      %p508 = scmp.lt.s32.totalorder %s24, 1
      %s509 = scalar_select %p508, %s24, 1
      %s510 = smul.addr %s509, 4
      %s511 = smul.addr %s510, 8
      %s512 = scalar_lea.vmem %s2, %s511
      %p513 = pneg %p92
      %p514 = pneg %p89
      %p515 = scmp.lt.s32.totalorder %s24, 1
      %s516 = scalar_select %p515, %s24, 1
      %s517 = smul.addr %s516, 4
      %s518 = smul.addr %s517, 8
      %s519 = scalar_lea.vmem %s3, %s518
      %p520 = pneg %p118
      %p521 = pneg %p115
      %p522 = scmp.lt.s32.totalorder %s24, 1
      %s523 = scalar_select %p522, %s24, 1
      %s524 = smul.addr %s523, 4
      %s525 = smul.addr %s524, 8
      %s526 = scalar_lea.vmem %s4, %s525
      %p527 = pneg %p144
      %p528 = pneg %p141
      %p529 = scmp.lt.s32.totalorder %s24, 1
      %s530 = scalar_select %p529, %s24, 1
      %s531 = smul.addr %s530, 4
      %s532 = smul.addr %s531, 8
      %s533 = scalar_lea.vmem %s5, %s532
      %p534 = pneg %p170
      %p535 = pneg %p167
      %p536 = scmp.lt.s32.totalorder %s24, 1
      %s537 = scalar_select %p536, %s24, 1
      %s538 = smul.addr %s537, 4
      %s539 = smul.addr %s538, 8
      %s540 = scalar_lea.vmem %s6, %s539
      %p541 = pneg %p196
      %p542 = pneg %p193
      %p543 = scmp.lt.s32.totalorder %s24, 1
      %s544 = scalar_select %p543, %s24, 1
      %s545 = smul.addr %s544, 4
      %s546 = smul.addr %s545, 8
      %s547 = scalar_lea.vmem %s7, %s546
      %p548 = pneg %p222
      %p549 = pneg %p219
      %p550 = scmp.lt.s32.totalorder %s24, 1
      %s551 = scalar_select %p550, %s24, 1
      %s552 = smul.addr %s551, 8
      %s553 = smul.addr %s552, 8
      %s554 = scalar_lea.vmem %s8, %s553
      %p555 = pneg %p248
      %p556 = pneg %p245
      %p557 = scmp.lt.s32.totalorder %s24, 1
      %s558 = scalar_select %p557, %s24, 1
      %s559 = smul.addr %s558, 8
      %s560 = smul.addr %s559, 8
      %s561 = scalar_lea.vmem %s9, %s560
      %p562 = pneg %p274
      %p563 = pneg %p271
      %p564 = scmp.lt.s32.totalorder %s24, 1
      %s565 = scalar_select %p564, %s24, 1
      %s566 = smul.addr %s565, 8
      %s567 = smul.addr %s566, 8
      %s568 = scalar_lea.vmem %s10, %s567
      %p569 = pneg %p300
      %p570 = pneg %p297
      %p571 = scmp.lt.s32.totalorder %s24, 1
      %s572 = scalar_select %p571, %s24, 1
      %s573 = smul.addr %s572, 4
      %s574 = scalar_lea.vmem %s11, %s573
      %p575 = pneg %p326
      %p576 = pneg %p323
      %p577 = scmp.lt.s32.totalorder %s24, 1
      %s578 = scalar_select %p577, %s24, 1
      %s579 = smul.addr %s578, 4
      %s580 = scalar_lea.vmem %s12, %s579
      %p581 = pneg %p352
      %p582 = pneg %p349
      %p583 = pneg %p378
      %p584 = pneg %p375
      %p585 = scmp.lt.s32.totalorder %s24, 1
      %s586 = scalar_select %p585, %s24, 1
      %s587 = smul.addr %s586, 4
      %s588 = scalar_lea.vmem %s13, %s587
      %p589 = scmp.lt.s32.totalorder %s24, 1
      %s590 = scalar_select %p589, %s24, 1
      %s591 = smul.addr %s590, 2
      %s592 = scalar_lea.vmem %s0, %s591
      %p593 = scmp.lt.s32.totalorder %s24, 1
      %s594 = scalar_select %p593, %s24, 1
      %s595 = smul.addr %s594, 4
      %s596 = smul.addr %s595, 8
      %s597 = scalar_lea.vmem %s2, %s596
      %p598 = scmp.lt.s32.totalorder %s24, 1
      %s599 = scalar_select %p598, %s24, 1
      %s600 = smul.addr %s599, 4
      %s601 = smul.addr %s600, 8
      %s602 = scalar_lea.vmem %s3, %s601
      %p603 = scmp.lt.s32.totalorder %s24, 1
      %s604 = scalar_select %p603, %s24, 1
      %s605 = smul.addr %s604, 4
      %s606 = smul.addr %s605, 8
      %s607 = scalar_lea.vmem %s4, %s606
      %p608 = scmp.lt.s32.totalorder %s24, 1
      %s609 = scalar_select %p608, %s24, 1
      %s610 = smul.addr %s609, 4
      %s611 = smul.addr %s610, 8
      %s612 = scalar_lea.vmem %s5, %s611
      %p613 = scmp.lt.s32.totalorder %s24, 1
      %s614 = scalar_select %p613, %s24, 1
      %s615 = smul.addr %s614, 4
      %s616 = smul.addr %s615, 8
      %s617 = scalar_lea.vmem %s6, %s616
      %p618 = scmp.lt.s32.totalorder %s24, 1
      %s619 = scalar_select %p618, %s24, 1
      %s620 = smul.addr %s619, 4
      %s621 = smul.addr %s620, 8
      %s622 = scalar_lea.vmem %s7, %s621
      %p623 = scmp.lt.s32.totalorder %s24, 1
      %s624 = scalar_select %p623, %s24, 1
      %s625 = smul.addr %s624, 8
      %s626 = smul.addr %s625, 8
      %s627 = scalar_lea.vmem %s8, %s626
      %p628 = scmp.lt.s32.totalorder %s24, 1
      %s629 = scalar_select %p628, %s24, 1
      %s630 = smul.addr %s629, 8
      %s631 = smul.addr %s630, 8
      %s632 = scalar_lea.vmem %s9, %s631
      %p633 = scmp.lt.s32.totalorder %s24, 1
      %s634 = scalar_select %p633, %s24, 1
      %s635 = smul.addr %s634, 8
      %s636 = smul.addr %s635, 8
      %s637 = scalar_lea.vmem %s10, %s636
      %p638 = scmp.lt.s32.totalorder %s24, 1
      %s639 = scalar_select %p638, %s24, 1
      %s640 = smul.addr %s639, 4
      %s641 = scalar_lea.vmem %s11, %s640
      %p642 = scmp.lt.s32.totalorder %s24, 1
      %s643 = scalar_select %p642, %s24, 1
      %s644 = smul.addr %s643, 4
      %s645 = scalar_lea.vmem %s12, %s644
      %p646 = scmp.lt.s32.totalorder %s24, 1
      %s647 = scalar_select %p646, %s24, 1
      %s648 = smul.addr %s647, 4
      %s649 = scalar_lea.vmem %s13, %s648
      %v650 = vld [vmem:[%s592] sm:$0x3]
      %v651 = vld [vmem:[%s1] sm:$0xff]
      %v652 = vld [vmem:[%s1 + $0x8] sm:$0xff]
      %v653 = vld [vmem:[%s1 + $0x10] sm:$0xff]
      %v654 = vld [vmem:[%s1 + $0x18] sm:$0xff]
      %656 = vset.pattern.permute.xlu0 0
      %657 = vperm.xlu0 %656, %v651
      %v658 = vpop.permute.xlu0 %657
      %661 = vset.pattern.permute.xlu0 0
      %662 = vperm.xlu0 %661, %v652
      %v663 = vpop.permute.xlu0 %662
      %666 = vset.pattern.permute.xlu0 0
      %667 = vperm.xlu0 %666, %v653
      %v668 = vpop.permute.xlu0 %667
      %671 = vset.pattern.permute.xlu0 0
      %672 = vperm.xlu0 %671, %v654
      %v673 = vpop.permute.xlu0 %672
      %675 = vset.pattern.permute.xlu0 1
      %676 = vperm.xlu0 %675, %v651
      %v677 = vpop.permute.xlu0 %676
      %679 = vset.pattern.permute.xlu0 1
      %680 = vperm.xlu0 %679, %v652
      %v681 = vpop.permute.xlu0 %680
      %683 = vset.pattern.permute.xlu0 1
      %684 = vperm.xlu0 %683, %v653
      %v685 = vpop.permute.xlu0 %684
      %687 = vset.pattern.permute.xlu0 1
      %688 = vperm.xlu0 %687, %v654
      %v689 = vpop.permute.xlu0 %688
      %vm691 = vcmask 523264
      %v692 = vsel %vm691, %v658, %v677
      %v693 = vsel %vm691, %v663, %v681
      %v694 = vsel %vm691, %v668, %v685
      %v695 = vsel %vm691, %v673, %v689
      %v696 = vld [vmem:[%s597] sm:$0xff]
      %v697 = vld [vmem:[%s597 + $0x8] sm:$0xff]
      %v698 = vld [vmem:[%s597 + $0x10] sm:$0xff]
      %v699 = vld [vmem:[%s597 + $0x18] sm:$0xff]
      %701 = vset.pattern.permute.xlu0 0
      %702 = vperm.xlu0 %701, %v696
      %v703 = vpop.permute.xlu0 %702
      %706 = vset.pattern.permute.xlu0 0
      %707 = vperm.xlu0 %706, %v697
      %v708 = vpop.permute.xlu0 %707
      %711 = vset.pattern.permute.xlu0 0
      %712 = vperm.xlu0 %711, %v698
      %v713 = vpop.permute.xlu0 %712
      %716 = vset.pattern.permute.xlu0 0
      %717 = vperm.xlu0 %716, %v699
      %v718 = vpop.permute.xlu0 %717
      %v720 = vlaneseq
      %v721 = vshrl.u32 %v720, 7
      %v722 = vsub.s32 0, %v721
      %v723 = vrot.slane %v650, %v722
      %v724 = vmul.f32 %v703, %v723
      %v725 = vmul.f32 %v708, %v723
      %v726 = vmul.f32 %v713, %v723
      %v727 = vmul.f32 %v718, %v723
      %v728 = vadd.f32 %v692, %v724
      %v729 = vadd.f32 %v693, %v725
      %v730 = vadd.f32 %v694, %v726
      %v731 = vadd.f32 %v695, %v727
      %732 = vset.pattern.permute.xlu0 1
      %733 = vperm.xlu0 %732, %v696
      %v734 = vpop.permute.xlu0 %733
      %736 = vset.pattern.permute.xlu0 1
      %737 = vperm.xlu0 %736, %v697
      %v738 = vpop.permute.xlu0 %737
      %740 = vset.pattern.permute.xlu0 1
      %741 = vperm.xlu0 %740, %v698
      %v742 = vpop.permute.xlu0 %741
      %744 = vset.pattern.permute.xlu0 1
      %745 = vperm.xlu0 %744, %v699
      %v746 = vpop.permute.xlu0 %745
      %v748 = vlaneseq
      %v749 = vshrl.u32 %v748, 7
      %v750 = vsub.s32 1, %v749
      %v751 = vrot.slane %v650, %v750
      %v752 = vmul.f32 %v734, %v751
      %v753 = vmul.f32 %v738, %v751
      %v754 = vmul.f32 %v742, %v751
      %v755 = vmul.f32 %v746, %v751
      %v756 = vadd.f32 %v728, %v752
      %v757 = vadd.f32 %v729, %v753
      %v758 = vadd.f32 %v730, %v754
      %v759 = vadd.f32 %v731, %v755
      %v760 = vld [vmem:[%s602] sm:$0xff]
      %v761 = vld [vmem:[%s602 + $0x8] sm:$0xff]
      %v762 = vld [vmem:[%s602 + $0x10] sm:$0xff]
      %v763 = vld [vmem:[%s602 + $0x18] sm:$0xff]
      %765 = vset.pattern.permute.xlu0 0
      %766 = vperm.xlu0 %765, %v760
      %v767 = vpop.permute.xlu0 %766
      %770 = vset.pattern.permute.xlu0 0
      %771 = vperm.xlu0 %770, %v761
      %v772 = vpop.permute.xlu0 %771
      %775 = vset.pattern.permute.xlu0 0
      %776 = vperm.xlu0 %775, %v762
      %v777 = vpop.permute.xlu0 %776
      %780 = vset.pattern.permute.xlu0 0
      %781 = vperm.xlu0 %780, %v763
      %v782 = vpop.permute.xlu0 %781
      %v784 = vmul.f32 %v756, %v767
      %v785 = vmul.f32 %v757, %v772
      %v786 = vmul.f32 %v758, %v777
      %v787 = vmul.f32 %v759, %v782
      %v788 = vld [vmem:[%s607] sm:$0xff]
      %v789 = vld [vmem:[%s607 + $0x8] sm:$0xff]
      %v790 = vld [vmem:[%s607 + $0x10] sm:$0xff]
      %v791 = vld [vmem:[%s607 + $0x18] sm:$0xff]
      %793 = vset.pattern.permute.xlu0 0
      %794 = vperm.xlu0 %793, %v788
      %v795 = vpop.permute.xlu0 %794
      %798 = vset.pattern.permute.xlu0 0
      %799 = vperm.xlu0 %798, %v789
      %v800 = vpop.permute.xlu0 %799
      %803 = vset.pattern.permute.xlu0 0
      %804 = vperm.xlu0 %803, %v790
      %v805 = vpop.permute.xlu0 %804
      %808 = vset.pattern.permute.xlu0 0
      %809 = vperm.xlu0 %808, %v791
      %v810 = vpop.permute.xlu0 %809
      %v812 = vadd.f32 %v784, %v795
      %v813 = vadd.f32 %v785, %v800
      %v814 = vadd.f32 %v786, %v805
      %v815 = vadd.f32 %v787, %v810
      %v816 = vmax.f32 %v812, 0.0
      %v817 = vmax.f32 %v813, 0.0
      %v818 = vmax.f32 %v814, 0.0
      %v819 = vmax.f32 %v815, 0.0
      %v820 = vld [vmem:[%s612] sm:$0xff]
      %v821 = vld [vmem:[%s612 + $0x8] sm:$0xff]
      %v822 = vld [vmem:[%s612 + $0x10] sm:$0xff]
      %v823 = vld [vmem:[%s612 + $0x18] sm:$0xff]
      %vm824 = vcmask 261120
      %v826 = vsel %vm824, %v820, 0
      %v829 = vsel %vm824, %v821, 0
      %v832 = vsel %vm824, %v822, 0
      %v835 = vsel %vm824, %v823, 0
      %837 = vmatprep.subr.mxu0 0.0
      %838 = vmatpush1.msra.mxu0 %v816
      %839 = vmatprep.subr.mxu0 0.0
      %840 = vmatpush1.msra.mxu0 %v817
      %841 = vmatprep.subr.mxu0 0.0
      %842 = vmatpush1.msra.mxu0 %v818
      %843 = vmatprep.subr.mxu0 0.0
      %844 = vmatpush1.msra.mxu0 %v819
      %845 = vmatprep.subr.mxu0 0.0
      %846 = vmatpush1.msra.mxu0 0.0
      %847 = vmatprep.subr.mxu0 0.0
      %848 = vmatpush1.msra.mxu0 0.0
      %849 = vmatprep.subr.mxu0 0.0
      %850 = vmatpush1.msra.mxu0 0.0
      %851 = vmatprep.subr.mxu0 0.0
      %852 = vmatpush1.msra.mxu0 0.0
      %853 = vmatprep.subr.mxu0 0.0
      %854 = vmatpush1.msra.mxu0 0.0
      %855 = vmatprep.subr.mxu0 0.0
      %856 = vmatpush1.msra.mxu0 0.0
      %857 = vmatprep.subr.mxu0 0.0
      %858 = vmatpush1.msra.mxu0 0.0
      %859 = vmatprep.subr.mxu0 0.0
      %860 = vmatpush1.msra.mxu0 0.0
      %861 = vmatprep.subr.mxu0 0.0
      %862 = vmatpush1.msra.mxu0 0.0
      %863 = vmatprep.subr.mxu0 0.0
      %864 = vmatpush1.msra.mxu0 0.0
      %865 = vmatprep.subr.mxu0 0.0
      %866 = vmatpush1.msra.mxu0 0.0
      %867 = vmatprep.subr.mxu0 0.0
      %868 = vmatpush1.msra.mxu0 0.0
      %869 = vmatprep.subr.mxu0 0.0
      %870 = vmatpush1.msra.mxu0 0.0
      %871 = vmatprep.subr.mxu0 0.0
      %872 = vmatpush1.msra.mxu0 0.0
      %873 = vmatprep.subr.mxu0 0.0
      %874 = vmatpush1.msra.mxu0 0.0
      %875 = vmatprep.subr.mxu0 0.0
      %876 = vmatpush1.msra.mxu0 0.0
      %877 = vmatprep.subr.mxu0 0.0
      %878 = vmatpush1.msra.mxu0 0.0
      %879 = vmatprep.subr.mxu0 0.0
      %880 = vmatpush1.msra.mxu0 0.0
      %881 = vmatprep.subr.mxu0 0.0
      %882 = vmatpush1.msra.mxu0 0.0
      %883 = vmatprep.subr.mxu0 0.0
      %884 = vmatpush1.msra.mxu0 0.0
      %885 = vmatprep.subr.mxu0 0.0
      %886 = vmatpush1.msra.mxu0 0.0
      %887 = vmatprep.subr.mxu0 0.0
      %888 = vmatpush1.msra.mxu0 0.0
      %889 = vmatprep.subr.mxu0 0.0
      %890 = vmatpush1.msra.mxu0 0.0
      %891 = vmatprep.subr.mxu0 0.0
      %892 = vmatpush1.msra.mxu0 0.0
      %893 = vmatprep.subr.mxu0 0.0
      %894 = vmatpush1.msra.mxu0 0.0
      %895 = vmatprep.subr.mxu0 0.0
      %896 = vmatpush1.msra.mxu0 0.0
      %897 = vmatprep.subr.mxu0 0.0
      %898 = vmatpush1.msra.mxu0 0.0
      %899 = vmatprep.subr.mxu0 0.0
      %900 = vmatpush1.msra.mxu0 0.0
      %901 = vmatprep.mubr.f32.mxu0 0.0
      %902 = vmatmul.mubr.f32.gmra.mrb[0].mxu0 %v826
      %v903 = vpop.f32.mrb[0].mxu0
      %v904 = vadd.f32 0.0, %v903
      %v905 = vpop.f32.mrb[0].mxu0
      %906 = vmatprep.mubr.f32.mxu0 0.0
      %907 = vmatmul.mubr.f32.gmra.mrb[0].mxu0 %v829
      %v908 = vpop.f32.mrb[0].mxu0
      %v909 = vadd.f32 0.0, %v908
      %v910 = vpop.f32.mrb[0].mxu0
      %911 = vmatprep.mubr.f32.mxu0 0.0
      %912 = vmatmul.mubr.f32.gmra.mrb[0].mxu0 %v832
      %v913 = vpop.f32.mrb[0].mxu0
      %v914 = vadd.f32 0.0, %v913
      %v915 = vpop.f32.mrb[0].mxu0
      %916 = vmatprep.mubr.f32.mxu0 0.0
      %917 = vmatmul.mubr.f32.gmra.mrb[0].mxu0 %v835
      %v918 = vpop.f32.mrb[0].mxu0
      %v919 = vadd.f32 0.0, %v918
      %v920 = vpop.f32.mrb[0].mxu0
      %921 = vdwg.mxu0
      %v922 = vld [vmem:[%s617] sm:$0xff]
      %v923 = vld [vmem:[%s617 + $0x8] sm:$0xff]
      %v924 = vld [vmem:[%s617 + $0x10] sm:$0xff]
      %v925 = vld [vmem:[%s617 + $0x18] sm:$0xff]
      %927 = vset.pattern.permute.xlu0 0
      %928 = vperm.xlu0 %927, %v922
      %v929 = vpop.permute.xlu0 %928
      %932 = vset.pattern.permute.xlu0 0
      %933 = vperm.xlu0 %932, %v923
      %v934 = vpop.permute.xlu0 %933
      %937 = vset.pattern.permute.xlu0 0
      %938 = vperm.xlu0 %937, %v924
      %v939 = vpop.permute.xlu0 %938
      %942 = vset.pattern.permute.xlu0 0
      %943 = vperm.xlu0 %942, %v925
      %v944 = vpop.permute.xlu0 %943
      %v946 = vmul.f32 %v904, %v929
      %v947 = vmul.f32 %v909, %v934
      %v948 = vmul.f32 %v914, %v939
      %v949 = vmul.f32 %v919, %v944
      %v950 = vld [vmem:[%s622] sm:$0xff]
      %v951 = vld [vmem:[%s622 + $0x8] sm:$0xff]
      %v952 = vld [vmem:[%s622 + $0x10] sm:$0xff]
      %v953 = vld [vmem:[%s622 + $0x18] sm:$0xff]
      %955 = vset.pattern.permute.xlu0 0
      %956 = vperm.xlu0 %955, %v950
      %v957 = vpop.permute.xlu0 %956
      %960 = vset.pattern.permute.xlu0 0
      %961 = vperm.xlu0 %960, %v951
      %v962 = vpop.permute.xlu0 %961
      %965 = vset.pattern.permute.xlu0 0
      %966 = vperm.xlu0 %965, %v952
      %v967 = vpop.permute.xlu0 %966
      %970 = vset.pattern.permute.xlu0 0
      %971 = vperm.xlu0 %970, %v953
      %v972 = vpop.permute.xlu0 %971
      %v974 = vadd.f32 %v946, %v957
      %v975 = vadd.f32 %v947, %v962
      %v976 = vadd.f32 %v948, %v967
      %v977 = vadd.f32 %v949, %v972
      %v978 = vmax.f32 %v974, 0.0
      %v979 = vmax.f32 %v975, 0.0
      %v980 = vmax.f32 %v976, 0.0
      %v981 = vmax.f32 %v977, 0.0
      %v982 = vld [vmem:[%s627] sm:$0xff]
      %v983 = vld [vmem:[%s627 + $0x8] sm:$0xff]
      %v984 = vld [vmem:[%s627 + $0x10] sm:$0xff]
      %v985 = vld [vmem:[%s627 + $0x18] sm:$0xff]
      %v987 = vsel %vm824, %v982, 0
      %v990 = vsel %vm824, %v983, 0
      %v993 = vsel %vm824, %v984, 0
      %v996 = vsel %vm824, %v985, 0
      %998 = vmatprep.subr.mxu0 0.0
      %999 = vmatpush1.msra.mxu0 %v978
      %1000 = vmatprep.subr.mxu0 0.0
      %1001 = vmatpush1.msra.mxu0 %v979
      %1002 = vmatprep.subr.mxu0 0.0
      %1003 = vmatpush1.msra.mxu0 %v980
      %1004 = vmatprep.subr.mxu0 0.0
      %1005 = vmatpush1.msra.mxu0 %v981
      %1006 = vmatprep.subr.mxu0 0.0
      %1007 = vmatpush1.msra.mxu0 0.0
      %1008 = vmatprep.subr.mxu0 0.0
      %1009 = vmatpush1.msra.mxu0 0.0
      %1010 = vmatprep.subr.mxu0 0.0
      %1011 = vmatpush1.msra.mxu0 0.0
      %1012 = vmatprep.subr.mxu0 0.0
      %1013 = vmatpush1.msra.mxu0 0.0
      %1014 = vmatprep.subr.mxu0 0.0
      %1015 = vmatpush1.msra.mxu0 0.0
      %1016 = vmatprep.subr.mxu0 0.0
      %1017 = vmatpush1.msra.mxu0 0.0
      %1018 = vmatprep.subr.mxu0 0.0
      %1019 = vmatpush1.msra.mxu0 0.0
      %1020 = vmatprep.subr.mxu0 0.0
      %1021 = vmatpush1.msra.mxu0 0.0
      %1022 = vmatprep.subr.mxu0 0.0
      %1023 = vmatpush1.msra.mxu0 0.0
      %1024 = vmatprep.subr.mxu0 0.0
      %1025 = vmatpush1.msra.mxu0 0.0
      %1026 = vmatprep.subr.mxu0 0.0
      %1027 = vmatpush1.msra.mxu0 0.0
      %1028 = vmatprep.subr.mxu0 0.0
      %1029 = vmatpush1.msra.mxu0 0.0
      %1030 = vmatprep.subr.mxu0 0.0
      %1031 = vmatpush1.msra.mxu0 0.0
      %1032 = vmatprep.subr.mxu0 0.0
      %1033 = vmatpush1.msra.mxu0 0.0
      %1034 = vmatprep.subr.mxu0 0.0
      %1035 = vmatpush1.msra.mxu0 0.0
      %1036 = vmatprep.subr.mxu0 0.0
      %1037 = vmatpush1.msra.mxu0 0.0
      %1038 = vmatprep.subr.mxu0 0.0
      %1039 = vmatpush1.msra.mxu0 0.0
      %1040 = vmatprep.subr.mxu0 0.0
      %1041 = vmatpush1.msra.mxu0 0.0
      %1042 = vmatprep.subr.mxu0 0.0
      %1043 = vmatpush1.msra.mxu0 0.0
      %1044 = vmatprep.subr.mxu0 0.0
      %1045 = vmatpush1.msra.mxu0 0.0
      %1046 = vmatprep.subr.mxu0 0.0
      %1047 = vmatpush1.msra.mxu0 0.0
      %1048 = vmatprep.subr.mxu0 0.0
      %1049 = vmatpush1.msra.mxu0 0.0
      %1050 = vmatprep.subr.mxu0 0.0
      %1051 = vmatpush1.msra.mxu0 0.0
      %1052 = vmatprep.subr.mxu0 0.0
      %1053 = vmatpush1.msra.mxu0 0.0
      %1054 = vmatprep.subr.mxu0 0.0
      %1055 = vmatpush1.msra.mxu0 0.0
      %1056 = vmatprep.subr.mxu0 0.0
      %1057 = vmatpush1.msra.mxu0 0.0
      %1058 = vmatprep.subr.mxu0 0.0
      %1059 = vmatpush1.msra.mxu0 0.0
      %1060 = vmatprep.subr.mxu0 0.0
      %1061 = vmatpush1.msra.mxu0 0.0
      %1062 = vmatprep.mubr.f32.mxu0 0.0
      %1063 = vmatmul.mubr.f32.gmra.mrb[0].mxu0 %v987
      %v1064 = vpop.f32.mrb[0].mxu0
      %v1065 = vadd.f32 0.0, %v1064
      %v1066 = vpop.f32.mrb[0].mxu0
      %1067 = vmatprep.mubr.f32.mxu0 0.0
      %1068 = vmatmul.mubr.f32.gmra.mrb[0].mxu0 %v990
      %v1069 = vpop.f32.mrb[0].mxu0
      %v1070 = vadd.f32 0.0, %v1069
      %v1071 = vpop.f32.mrb[0].mxu0
      %1072 = vmatprep.mubr.f32.mxu0 0.0
      %1073 = vmatmul.mubr.f32.gmra.mrb[0].mxu0 %v993
      %v1074 = vpop.f32.mrb[0].mxu0
      %v1075 = vadd.f32 0.0, %v1074
      %v1076 = vpop.f32.mrb[0].mxu0
      %1077 = vmatprep.mubr.f32.mxu0 0.0
      %1078 = vmatmul.mubr.f32.gmra.mrb[0].mxu0 %v996
      %v1079 = vpop.f32.mrb[0].mxu0
      %v1080 = vadd.f32 0.0, %v1079
      %v1081 = vpop.f32.mrb[0].mxu0
      %1082 = vdwg.mxu0
      %v1083 = vld [vmem:[%s632] sm:$0xff]
      %v1084 = vld [vmem:[%s632 + $0x8] sm:$0xff]
      %v1085 = vld [vmem:[%s632 + $0x10] sm:$0xff]
      %v1086 = vld [vmem:[%s632 + $0x18] sm:$0xff]
      %1088 = vset.pattern.permute.xlu0 0
      %1089 = vperm.xlu0 %1088, %v1083
      %v1090 = vpop.permute.xlu0 %1089
      %1093 = vset.pattern.permute.xlu0 0
      %1094 = vperm.xlu0 %1093, %v1084
      %v1095 = vpop.permute.xlu0 %1094
      %1098 = vset.pattern.permute.xlu0 0
      %1099 = vperm.xlu0 %1098, %v1085
      %v1100 = vpop.permute.xlu0 %1099
      %1103 = vset.pattern.permute.xlu0 0
      %1104 = vperm.xlu0 %1103, %v1086
      %v1105 = vpop.permute.xlu0 %1104
      %v1107 = vmul.f32 %v1065, %v1090
      %v1108 = vmul.f32 %v1070, %v1095
      %v1109 = vmul.f32 %v1075, %v1100
      %v1110 = vmul.f32 %v1080, %v1105
      %v1111 = vld [vmem:[%s637] sm:$0xff]
      %v1112 = vld [vmem:[%s637 + $0x8] sm:$0xff]
      %v1113 = vld [vmem:[%s637 + $0x10] sm:$0xff]
      %v1114 = vld [vmem:[%s637 + $0x18] sm:$0xff]
      %1116 = vset.pattern.permute.xlu0 0
      %1117 = vperm.xlu0 %1116, %v1111
      %v1118 = vpop.permute.xlu0 %1117
      %1121 = vset.pattern.permute.xlu0 0
      %1122 = vperm.xlu0 %1121, %v1112
      %v1123 = vpop.permute.xlu0 %1122
      %1126 = vset.pattern.permute.xlu0 0
      %1127 = vperm.xlu0 %1126, %v1113
      %v1128 = vpop.permute.xlu0 %1127
      %1131 = vset.pattern.permute.xlu0 0
      %1132 = vperm.xlu0 %1131, %v1114
      %v1133 = vpop.permute.xlu0 %1132
      %v1135 = vadd.f32 %v1107, %v1118
      %v1136 = vadd.f32 %v1108, %v1123
      %v1137 = vadd.f32 %v1109, %v1128
      %v1138 = vadd.f32 %v1110, %v1133
      %v1139 = vmax.f32 %v1135, 0.0
      %v1140 = vmax.f32 %v1136, 0.0
      %v1141 = vmax.f32 %v1137, 0.0
      %v1142 = vmax.f32 %v1138, 0.0
      %s1143 = scalar_lea.vmem %s627, 32
      %v1144 = vld [vmem:[%s1143] sm:$0xff]
      %v1145 = vld [vmem:[%s1143 + $0x8] sm:$0xff]
      %v1146 = vld [vmem:[%s1143 + $0x10] sm:$0xff]
      %v1147 = vld [vmem:[%s1143 + $0x18] sm:$0xff]
      %v1149 = vsel %vm824, %v1144, 0
      %v1152 = vsel %vm824, %v1145, 0
      %v1155 = vsel %vm824, %v1146, 0
      %v1158 = vsel %vm824, %v1147, 0
      %1160 = vmatprep.subr.mxu0 0.0
      %1161 = vmatpush1.msra.mxu0 %v1139
      %1162 = vmatprep.subr.mxu0 0.0
      %1163 = vmatpush1.msra.mxu0 %v1140
      %1164 = vmatprep.subr.mxu0 0.0
      %1165 = vmatpush1.msra.mxu0 %v1141
      %1166 = vmatprep.subr.mxu0 0.0
      %1167 = vmatpush1.msra.mxu0 %v1142
      %1168 = vmatprep.subr.mxu0 0.0
      %1169 = vmatpush1.msra.mxu0 0.0
      %1170 = vmatprep.subr.mxu0 0.0
      %1171 = vmatpush1.msra.mxu0 0.0
      %1172 = vmatprep.subr.mxu0 0.0
      %1173 = vmatpush1.msra.mxu0 0.0
      %1174 = vmatprep.subr.mxu0 0.0
      %1175 = vmatpush1.msra.mxu0 0.0
      %1176 = vmatprep.subr.mxu0 0.0
      %1177 = vmatpush1.msra.mxu0 0.0
      %1178 = vmatprep.subr.mxu0 0.0
      %1179 = vmatpush1.msra.mxu0 0.0
      %1180 = vmatprep.subr.mxu0 0.0
      %1181 = vmatpush1.msra.mxu0 0.0
      %1182 = vmatprep.subr.mxu0 0.0
      %1183 = vmatpush1.msra.mxu0 0.0
      %1184 = vmatprep.subr.mxu0 0.0
      %1185 = vmatpush1.msra.mxu0 0.0
      %1186 = vmatprep.subr.mxu0 0.0
      %1187 = vmatpush1.msra.mxu0 0.0
      %1188 = vmatprep.subr.mxu0 0.0
      %1189 = vmatpush1.msra.mxu0 0.0
      %1190 = vmatprep.subr.mxu0 0.0
      %1191 = vmatpush1.msra.mxu0 0.0
      %1192 = vmatprep.subr.mxu0 0.0
      %1193 = vmatpush1.msra.mxu0 0.0
      %1194 = vmatprep.subr.mxu0 0.0
      %1195 = vmatpush1.msra.mxu0 0.0
      %1196 = vmatprep.subr.mxu0 0.0
      %1197 = vmatpush1.msra.mxu0 0.0
      %1198 = vmatprep.subr.mxu0 0.0
      %1199 = vmatpush1.msra.mxu0 0.0
      %1200 = vmatprep.subr.mxu0 0.0
      %1201 = vmatpush1.msra.mxu0 0.0
      %1202 = vmatprep.subr.mxu0 0.0
      %1203 = vmatpush1.msra.mxu0 0.0
      %1204 = vmatprep.subr.mxu0 0.0
      %1205 = vmatpush1.msra.mxu0 0.0
      %1206 = vmatprep.subr.mxu0 0.0
      %1207 = vmatpush1.msra.mxu0 0.0
      %1208 = vmatprep.subr.mxu0 0.0
      %1209 = vmatpush1.msra.mxu0 0.0
      %1210 = vmatprep.subr.mxu0 0.0
      %1211 = vmatpush1.msra.mxu0 0.0
      %1212 = vmatprep.subr.mxu0 0.0
      %1213 = vmatpush1.msra.mxu0 0.0
      %1214 = vmatprep.subr.mxu0 0.0
      %1215 = vmatpush1.msra.mxu0 0.0
      %1216 = vmatprep.subr.mxu0 0.0
      %1217 = vmatpush1.msra.mxu0 0.0
      %1218 = vmatprep.subr.mxu0 0.0
      %1219 = vmatpush1.msra.mxu0 0.0
      %1220 = vmatprep.subr.mxu0 0.0
      %1221 = vmatpush1.msra.mxu0 0.0
      %1222 = vmatprep.subr.mxu0 0.0
      %1223 = vmatpush1.msra.mxu0 0.0
      %1224 = vmatprep.mubr.f32.mxu0 0.0
      %1225 = vmatmul.mubr.f32.gmra.mrb[0].mxu0 %v1149
      %v1226 = vpop.f32.mrb[0].mxu0
      %v1227 = vadd.f32 0.0, %v1226
      %v1228 = vpop.f32.mrb[0].mxu0
      %1229 = vmatprep.mubr.f32.mxu0 0.0
      %1230 = vmatmul.mubr.f32.gmra.mrb[0].mxu0 %v1152
      %v1231 = vpop.f32.mrb[0].mxu0
      %v1232 = vadd.f32 0.0, %v1231
      %v1233 = vpop.f32.mrb[0].mxu0
      %1234 = vmatprep.mubr.f32.mxu0 0.0
      %1235 = vmatmul.mubr.f32.gmra.mrb[0].mxu0 %v1155
      %v1236 = vpop.f32.mrb[0].mxu0
      %v1237 = vadd.f32 0.0, %v1236
      %v1238 = vpop.f32.mrb[0].mxu0
      %1239 = vmatprep.mubr.f32.mxu0 0.0
      %1240 = vmatmul.mubr.f32.gmra.mrb[0].mxu0 %v1158
      %v1241 = vpop.f32.mrb[0].mxu0
      %v1242 = vadd.f32 0.0, %v1241
      %v1243 = vpop.f32.mrb[0].mxu0
      %1244 = vdwg.mxu0
      %s1245 = scalar_lea.vmem %s632, 32
      %v1246 = vld [vmem:[%s1245] sm:$0xff]
      %v1247 = vld [vmem:[%s1245 + $0x8] sm:$0xff]
      %v1248 = vld [vmem:[%s1245 + $0x10] sm:$0xff]
      %v1249 = vld [vmem:[%s1245 + $0x18] sm:$0xff]
      %1251 = vset.pattern.permute.xlu0 0
      %1252 = vperm.xlu0 %1251, %v1246
      %v1253 = vpop.permute.xlu0 %1252
      %1256 = vset.pattern.permute.xlu0 0
      %1257 = vperm.xlu0 %1256, %v1247
      %v1258 = vpop.permute.xlu0 %1257
      %1261 = vset.pattern.permute.xlu0 0
      %1262 = vperm.xlu0 %1261, %v1248
      %v1263 = vpop.permute.xlu0 %1262
      %1266 = vset.pattern.permute.xlu0 0
      %1267 = vperm.xlu0 %1266, %v1249
      %v1268 = vpop.permute.xlu0 %1267
      %v1270 = vmul.f32 %v1227, %v1253
      %v1271 = vmul.f32 %v1232, %v1258
      %v1272 = vmul.f32 %v1237, %v1263
      %v1273 = vmul.f32 %v1242, %v1268
      %s1274 = scalar_lea.vmem %s637, 32
      %v1275 = vld [vmem:[%s1274] sm:$0xff]
      %v1276 = vld [vmem:[%s1274 + $0x8] sm:$0xff]
      %v1277 = vld [vmem:[%s1274 + $0x10] sm:$0xff]
      %v1278 = vld [vmem:[%s1274 + $0x18] sm:$0xff]
      %1280 = vset.pattern.permute.xlu0 0
      %1281 = vperm.xlu0 %1280, %v1275
      %v1282 = vpop.permute.xlu0 %1281
      %1285 = vset.pattern.permute.xlu0 0
      %1286 = vperm.xlu0 %1285, %v1276
      %v1287 = vpop.permute.xlu0 %1286
      %1290 = vset.pattern.permute.xlu0 0
      %1291 = vperm.xlu0 %1290, %v1277
      %v1292 = vpop.permute.xlu0 %1291
      %1295 = vset.pattern.permute.xlu0 0
      %1296 = vperm.xlu0 %1295, %v1278
      %v1297 = vpop.permute.xlu0 %1296
      %v1299 = vadd.f32 %v1270, %v1282
      %v1300 = vadd.f32 %v1271, %v1287
      %v1301 = vadd.f32 %v1272, %v1292
      %v1302 = vadd.f32 %v1273, %v1297
      %v1303 = vmax.f32 %v1299, 0.0
      %v1304 = vmax.f32 %v1300, 0.0
      %v1305 = vmax.f32 %v1301, 0.0
      %v1306 = vmax.f32 %v1302, 0.0
      %v1307 = vld [vmem:[%s641] sm:$0x7]
      %v1308 = vld [vmem:[%s645] sm:$0x7]
      %1310 = vset.pattern.permute.xlu0 0
      %1311 = vperm.xlu0 %1310, %v1308
      %v1312 = vpop.permute.xlu0 %1311
      %v1315 = vsel %vm824, %v1307, 0
      %1317 = vmatprep.subr.mxu0 0.0
      %1318 = vmatpush1.msra.mxu0 %v1303
      %1319 = vmatprep.subr.mxu0 0.0
      %1320 = vmatpush1.msra.mxu0 %v1304
      %1321 = vmatprep.subr.mxu0 0.0
      %1322 = vmatpush1.msra.mxu0 %v1305
      %1323 = vmatprep.subr.mxu0 0.0
      %1324 = vmatpush1.msra.mxu0 %v1306
      %1325 = vmatprep.subr.mxu0 0.0
      %1326 = vmatpush1.msra.mxu0 0.0
      %1327 = vmatprep.subr.mxu0 0.0
      %1328 = vmatpush1.msra.mxu0 0.0
      %1329 = vmatprep.subr.mxu0 0.0
      %1330 = vmatpush1.msra.mxu0 0.0
      %1331 = vmatprep.subr.mxu0 0.0
      %1332 = vmatpush1.msra.mxu0 0.0
      %1333 = vmatprep.subr.mxu0 0.0
      %1334 = vmatpush1.msra.mxu0 0.0
      %1335 = vmatprep.subr.mxu0 0.0
      %1336 = vmatpush1.msra.mxu0 0.0
      %1337 = vmatprep.subr.mxu0 0.0
      %1338 = vmatpush1.msra.mxu0 0.0
      %1339 = vmatprep.subr.mxu0 0.0
      %1340 = vmatpush1.msra.mxu0 0.0
      %1341 = vmatprep.subr.mxu0 0.0
      %1342 = vmatpush1.msra.mxu0 0.0
      %1343 = vmatprep.subr.mxu0 0.0
      %1344 = vmatpush1.msra.mxu0 0.0
      %1345 = vmatprep.subr.mxu0 0.0
      %1346 = vmatpush1.msra.mxu0 0.0
      %1347 = vmatprep.subr.mxu0 0.0
      %1348 = vmatpush1.msra.mxu0 0.0
      %1349 = vmatprep.subr.mxu0 0.0
      %1350 = vmatpush1.msra.mxu0 0.0
      %1351 = vmatprep.subr.mxu0 0.0
      %1352 = vmatpush1.msra.mxu0 0.0
      %1353 = vmatprep.subr.mxu0 0.0
      %1354 = vmatpush1.msra.mxu0 0.0
      %1355 = vmatprep.subr.mxu0 0.0
      %1356 = vmatpush1.msra.mxu0 0.0
      %1357 = vmatprep.subr.mxu0 0.0
      %1358 = vmatpush1.msra.mxu0 0.0
      %1359 = vmatprep.subr.mxu0 0.0
      %1360 = vmatpush1.msra.mxu0 0.0
      %1361 = vmatprep.subr.mxu0 0.0
      %1362 = vmatpush1.msra.mxu0 0.0
      %1363 = vmatprep.subr.mxu0 0.0
      %1364 = vmatpush1.msra.mxu0 0.0
      %1365 = vmatprep.subr.mxu0 0.0
      %1366 = vmatpush1.msra.mxu0 0.0
      %1367 = vmatprep.subr.mxu0 0.0
      %1368 = vmatpush1.msra.mxu0 0.0
      %1369 = vmatprep.subr.mxu0 0.0
      %1370 = vmatpush1.msra.mxu0 0.0
      %1371 = vmatprep.subr.mxu0 0.0
      %1372 = vmatpush1.msra.mxu0 0.0
      %1373 = vmatprep.subr.mxu0 0.0
      %1374 = vmatpush1.msra.mxu0 0.0
      %1375 = vmatprep.subr.mxu0 0.0
      %1376 = vmatpush1.msra.mxu0 0.0
      %1377 = vmatprep.subr.mxu0 0.0
      %1378 = vmatpush1.msra.mxu0 0.0
      %1379 = vmatprep.subr.mxu0 0.0
      %1380 = vmatpush1.msra.mxu0 0.0
      %1381 = vmatprep.mubr.f32.mxu0 0.0
      %1382 = vmatmul.mubr.f32.gmra.mrb[0].mxu0 %v1315
      %v1383 = vpop.f32.mrb[0].mxu0
      %v1384 = vadd.f32 %v1312, %v1383
      %v1385 = vpop.f32.mrb[0].mxu0
      %1386 = vdwg.mxu0
      %1387 = vst [vmem:[%s649] sm:$0x7] %v1384
      %p1388 = scmp.lt.s32.totalorder %s24, 1
      %s1389 = scalar_select %p1388, %s24, 1
      %s1390 = smul.addr %s1389, 4
      %s1391 = scalar_lea.vmem %s13, %s1390
      // Predicated region
      $region73: #{tpu_custom_call.1} parent=71 // pred_check
        %p1392 = pneg %p375
      $region74: #{tpu_custom_call.1} parent=71 // pred_check_branch
        %1394 = sbr.rel (%p1392) target = $region76
      $region75: #{tpu_custom_call.1} parent=71 // pred_region
        _
      $region76: #{tpu_custom_call.1} parent=71 // pred_fallthru
        _
    $region72: #{tpu_custom_call.1} parent=5 // pred_fallthru
      _
    %p1395 = scmp.le.s32.totalorder 2, %s19
    // Predicated region
    $region77: #{tpu_custom_call.1} parent=5 // pred_check
      %p1396 = pneg %p1395
    $region78: #{tpu_custom_call.1} parent=5 // pred_check_branch
      %1398 = sbr.rel (%p1396) target = $region80
    $region79: #{tpu_custom_call.1} parent=5 // pred_region
      %s1399 = ssub.s32 %s19, 2
      // Predicated region
      $region81: #{tpu_custom_call.1} parent=79 // pred_check
        %p1400 = pneg %p381
      $region82: #{tpu_custom_call.1} parent=79 // pred_check_branch
        %1402 = sbr.rel (%p1400) target = $region84
      $region83: #{tpu_custom_call.1} parent=79 // pred_region
        %p1403 = scmp.lt.s32.totalorder %s25, 1
        %s1404 = scalar_select %p1403, %s25, 1
        %s1405 = smul.addr %s1404, 4
        %s1406 = scalar_lea.vmem %s13, %s1405
      $region84: #{tpu_custom_call.1} parent=79 // pred_fallthru
        _
    $region80: #{tpu_custom_call.1} parent=5 // pred_fallthru
      _
  $region6: #{tpu_custom_call.1} parent=0 // loop_footer
    %s23 = sadd.s32 1, %s19
  $region7: #{tpu_custom_call.1} parent=0 // loop_footer_branch
    %18 = sbr.rel target = $region3
  $region8: #{tpu_custom_call.1} parent=0 // loop_exit
    _

</llo_original>
